<compile_context>
chip_gen: v7x
topology: tpu7x:2x2x1
jax: 0.10.0
libtpu: 0.0.40
codegen_flags: <defaults>
</compile_context>

<pallas_src>
import functools
import math

import jax
import jax.numpy as jnp
from jax import lax
from jax.experimental import pallas as pl
from jax.experimental.pallas import tpu as pltpu


MLP_TK = 1024                      # fc1 contraction tile (multiple of 128)
VMEM_LIMIT = 48 * 1024 * 1024      # < 64 MiB physical VMEM per TC on v7x


def _round_up(x, m):
    return ((x + m - 1) // m) * m


# ---------------------------------------------------------------------------
# Kernel 1: fused 3-layer "same"-padded Conv1d + ReLU stack
#           (one batch element per grid step, weights resident across steps)
# ---------------------------------------------------------------------------
def conv_stack_kernel(x_ref, w1_ref, b1_ref, w2_ref, b2_ref, w3_ref, b3_ref,
                      o_ref, xpad1, xpad2, xpad3, *, L, ks):
    K1, K2, K3 = ks
    bf16 = jnp.bfloat16

    def fill_pad(xpad, act, K):
        # conv1d_same_padding: left = (K-1)//2, right = K//2 zero padding.
        left, right = (K - 1) // 2, K // 2
        C = xpad.shape[1]
        if left > 0:
            xpad[0:left, :] = jnp.zeros((left, C), xpad.dtype)
        if right > 0:
            xpad[left + L:left + L + right, :] = jnp.zeros((right, C), xpad.dtype)
        xpad[left:left + L, :] = act.astype(xpad.dtype)

    # --- layer 1: per-tap matmuls (embedding-dim contraction is already deep)
    fill_pad(xpad1, x_ref[0], K1)
    C1p = w1_ref.shape[2]
    acc = jnp.zeros((L, C1p), jnp.float32)
    for k in range(K1):                                   # static tap loop
        acc = acc + jnp.dot(xpad1[k:k + L, :].astype(bf16), w1_ref[k],
                            preferred_element_type=jnp.float32)
    a1 = jnp.maximum(acc + b1_ref[...], 0.0)              # (L, C1p)

    # --- layer 2: im2col slab -> one matmul with contraction K2*C1p
    fill_pad(xpad2, a1, K2)
    slab2 = jnp.concatenate([xpad2[k:k + L, :] for k in range(K2)], axis=1)
    a2 = jnp.maximum(
        jnp.dot(slab2.astype(bf16), w2_ref[...],
                preferred_element_type=jnp.float32) + b2_ref[...], 0.0)

    # --- layer 3: im2col slab -> one matmul with contraction K3*C2p
    fill_pad(xpad3, a2, K3)
    slab3 = jnp.concatenate([xpad3[k:k + L, :] for k in range(K3)], axis=1)
    a3 = jnp.maximum(
        jnp.dot(slab3.astype(bf16), w3_ref[...],
                preferred_element_type=jnp.float32) + b3_ref[...], 0.0)

    o_ref[0] = a3.astype(o_ref.dtype)


def conv_stack(x, cp):
    """x: (B, L, Cin0) f32 -> (B, L, C3p) f32 (padded channels are zero)."""
    B, L, Cin0 = x.shape
    K1, K2, K3 = cp["ks"]
    C1p = cp["w1"].shape[2]
    C2p = cp["w2"].shape[1]
    C3p = cp["w3"].shape[1]
    kern = functools.partial(conv_stack_kernel, L=L, ks=(K1, K2, K3))
    return pl.pallas_call(
        kern,
        out_shape=jax.ShapeDtypeStruct((B, L, C3p), jnp.float32),
        grid=(B,),
        in_specs=[
            pl.BlockSpec((1, L, Cin0), lambda i: (i, 0, 0)),
            pl.BlockSpec(cp["w1"].shape, lambda i: (0, 0, 0)),
            pl.BlockSpec(cp["b1"].shape, lambda i: (0, 0)),
            pl.BlockSpec(cp["w2"].shape, lambda i: (0, 0)),
            pl.BlockSpec(cp["b2"].shape, lambda i: (0, 0)),
            pl.BlockSpec(cp["w3"].shape, lambda i: (0, 0)),
            pl.BlockSpec(cp["b3"].shape, lambda i: (0, 0)),
        ],
        out_specs=pl.BlockSpec((1, L, C3p), lambda i: (i, 0, 0)),
        scratch_shapes=[
            pltpu.VMEM((L + K1 - 1, Cin0), jnp.float32),
            pltpu.VMEM((L + K2 - 1, C1p), jnp.float32),
            pltpu.VMEM((L + K3 - 1, C2p), jnp.float32),
        ],
        compiler_params=pltpu.CompilerParams(
            dimension_semantics=("parallel",),
            vmem_limit_bytes=VMEM_LIMIT),
    )(x, cp["w1"], cp["b1"], cp["w2"], cp["b2"], cp["w3"], cp["b3"])


# ---------------------------------------------------------------------------
# Kernel 2: both multi-head cross-attention directions + 0.5/0.5 residual mix
# ---------------------------------------------------------------------------
def cross_attn_pair_kernel(drug_ref, prot_ref, wq_ref, wk_ref, wv_ref, wo_ref,
                           bq_ref, bk_ref, bv_ref, bo_ref,
                           od_ref, op_ref, *, num_heads, e_true):
    bf16 = jnp.bfloat16
    dh = e_true // num_heads
    scale = 1.0 / math.sqrt(dh)

    xd = drug_ref[0]                              # (Ld, Ep) f32
    xp = prot_ref[0]                              # (Lp, Ep) f32
    wq = wq_ref[...]; wk = wk_ref[...]; wv = wv_ref[...]; wo = wo_ref[...]
    bq = bq_ref[...]; bk = bk_ref[...]; bv = bv_ref[...]; bo = bo_ref[...]

    xd16 = xd.astype(bf16)
    xp16 = xp.astype(bf16)
    q_d = jnp.dot(xd16, wq, preferred_element_type=jnp.float32) + bq
    k_d = jnp.dot(xd16, wk, preferred_element_type=jnp.float32) + bk
    v_d = jnp.dot(xd16, wv, preferred_element_type=jnp.float32) + bv
    q_p = jnp.dot(xp16, wq, preferred_element_type=jnp.float32) + bq
    k_p = jnp.dot(xp16, wk, preferred_element_type=jnp.float32) + bk
    v_p = jnp.dot(xp16, wv, preferred_element_type=jnp.float32) + bv

    def attend_mix(q, k, v, x_q):
        Lq, Ep = q.shape[0], q.shape[1]
        out = jnp.zeros((Lq, Ep), jnp.float32)
        qs = q * scale
        for h in range(num_heads):                # static head loop
            lo, hi = h * dh, (h + 1) * dh
            qh = qs[:, lo:hi].astype(bf16)
            kh = k[:, lo:hi].astype(bf16)
            vh = v[:, lo:hi].astype(bf16)
            # scores without an explicit key transpose
            s = lax.dot_general(qh, kh, (((1,), (1,)), ((), ())),
                                preferred_element_type=jnp.float32)  # (Lq, Lk)
            s = s - jnp.max(s, axis=-1, keepdims=True)
            p = jnp.exp(s)
            p = p * pl.reciprocal(jnp.sum(p, axis=-1, keepdims=True), approx=True)
            oh = jnp.dot(p.astype(bf16), vh,
                         preferred_element_type=jnp.float32)          # (Lq, dh)
            # per-head slice of the output projection (avoids head concat)
            out = out + jnp.dot(oh.astype(bf16), wo[lo:hi, :],
                                preferred_element_type=jnp.float32)
        # conv*0.5 + att*0.5 ; query side IS the conv output
        return 0.5 * x_q + 0.5 * (out + bo)

    od_ref[0] = attend_mix(q_d, k_p, v_p, xd).astype(od_ref.dtype)
    op_ref[0] = attend_mix(q_p, k_d, v_d, xp).astype(op_ref.dtype)


def cross_attention_pair(drug_conv, prot_conv, mha):
    B, Ld, Ep = drug_conv.shape
    _, Lp, _ = prot_conv.shape
    kern = functools.partial(cross_attn_pair_kernel,
                             num_heads=mha["num_heads"], e_true=mha["e_true"])
    return pl.pallas_call(
        kern,
        out_shape=(jax.ShapeDtypeStruct((B, Ld, Ep), jnp.float32),
                   jax.ShapeDtypeStruct((B, Lp, Ep), jnp.float32)),
        grid=(B,),
        in_specs=[
            pl.BlockSpec((1, Ld, Ep), lambda i: (i, 0, 0)),
            pl.BlockSpec((1, Lp, Ep), lambda i: (i, 0, 0)),
            pl.BlockSpec((Ep, Ep), lambda i: (0, 0)),
            pl.BlockSpec((Ep, Ep), lambda i: (0, 0)),
            pl.BlockSpec((Ep, Ep), lambda i: (0, 0)),
            pl.BlockSpec((Ep, Ep), lambda i: (0, 0)),
            pl.BlockSpec((1, Ep), lambda i: (0, 0)),
            pl.BlockSpec((1, Ep), lambda i: (0, 0)),
            pl.BlockSpec((1, Ep), lambda i: (0, 0)),
            pl.BlockSpec((1, Ep), lambda i: (0, 0)),
        ],
        out_specs=[
            pl.BlockSpec((1, Ld, Ep), lambda i: (i, 0, 0)),
            pl.BlockSpec((1, Lp, Ep), lambda i: (i, 0, 0)),
        ],
        compiler_params=pltpu.CompilerParams(
            dimension_semantics=("parallel",),
            vmem_limit_bytes=VMEM_LIMIT),
    )(drug_conv, prot_conv, mha["wq"], mha["wk"], mha["wv"], mha["wo"],
      mha["bq"], mha["bk"], mha["bv"], mha["bo"])


# ---------------------------------------------------------------------------
# Kernel 3: MLP head with the fc1 contraction tiled over the grid
# ---------------------------------------------------------------------------
def mlp_kernel(pair_ref, w1_ref, b1_ref, w2_ref, b2_ref, w3_ref, b3_ref,
               w4_ref, b4_ref, o_ref, acc_ref):
    bf16 = jnp.bfloat16
    k = pl.program_id(0)

    @pl.when(k == 0)
    def _():
        acc_ref[...] = jnp.zeros_like(acc_ref)

    acc_ref[...] += jnp.dot(pair_ref[...].astype(bf16), w1_ref[...],
                            preferred_element_type=jnp.float32)

    @pl.when(k == pl.num_programs(0) - 1)
    def _():
        def lrelu(v):
            return jnp.where(v >= 0.0, v, 0.01 * v)   # nn.LeakyReLU default

        h = lrelu(acc_ref[...] + b1_ref[...])
        h = lrelu(jnp.dot(h.astype(bf16), w2_ref[...],
                          preferred_element_type=jnp.float32) + b2_ref[...])
        h = lrelu(jnp.dot(h.astype(bf16), w3_ref[...],
                          preferred_element_type=jnp.float32) + b3_ref[...])
        out = jnp.dot(h.astype(bf16), w4_ref[...],
                      preferred_element_type=jnp.float32) + b4_ref[...]
        o_ref[...] = out.astype(o_ref.dtype)


def mlp_head(pair, mp):
    """pair: (B, F_pad) f32, already in (l, e_pad) flatten order."""
    B, F_pad = pair.shape
    TK = mp["tk"]
    nk = F_pad // TK
    H1 = mp["w1"].shape[1]
    return pl.pallas_call(
        mlp_kernel,
        out_shape=jax.ShapeDtypeStruct((B, 2), jnp.float32),
        grid=(nk,),
        in_specs=[
            pl.BlockSpec((B, TK), lambda k: (0, k)),
            pl.BlockSpec((TK, H1), lambda k: (k, 0)),
            pl.BlockSpec(mp["b1"].shape, lambda k: (0, 0)),
            pl.BlockSpec(mp["w2"].shape, lambda k: (0, 0)),
            pl.BlockSpec(mp["b2"].shape, lambda k: (0, 0)),
            pl.BlockSpec(mp["w3"].shape, lambda k: (0, 0)),
            pl.BlockSpec(mp["b3"].shape, lambda k: (0, 0)),
            pl.BlockSpec(mp["w4"].shape, lambda k: (0, 0)),
            pl.BlockSpec(mp["b4"].shape, lambda k: (0, 0)),
        ],
        out_specs=pl.BlockSpec((B, 2), lambda k: (0, 0)),
        scratch_shapes=[pltpu.VMEM((B, H1), jnp.float32)],
        compiler_params=pltpu.CompilerParams(
            dimension_semantics=("arbitrary",),
            vmem_limit_bytes=VMEM_LIMIT),
    )(pair, mp["w1"], mp["b1"], mp["w2"], mp["b2"], mp["w3"], mp["b3"],
      mp["w4"], mp["b4"])


# ---------------------------------------------------------------------------
# Full forward
# ---------------------------------------------------------------------------
def mcanet_forward(drugembed, proteinembed, pp):
    drug_conv = conv_stack(drugembed, pp["drug_conv"])        # (B, Ld, Ep)
    prot_conv = conv_stack(proteinembed, pp["prot_conv"])     # (B, Lp, Ep)

    drug_mix, prot_mix = cross_attention_pair(drug_conv, prot_conv, pp["mha"])

    # flatten in (l, e_pad) order (pure reshape, no transpose); fc1's weight
    # was pre-rearranged into the same order, so this matches the PyTorch
    # (B, E, Ld+Lp) row-major flatten exactly.
    B = drugembed.shape[0]
    pair = jnp.concatenate([drug_mix.reshape(B, -1), prot_mix.reshape(B, -1)],
                           axis=1)
    F_pad = pp["mlp"]["w1"].shape[0]
    if F_pad > pair.shape[1]:
        pair = jnp.pad(pair, ((0, 0), (0, F_pad - pair.shape[1])))

    # TODO(synk): dropout1/2/3 (p=0.1) are identity at inference and omitted.
    return mlp_head(pair, pp["mlp"])


# ---------------------------------------------------------------------------
# Parameter construction (module-faithful shapes) and kernel-side preparation
# (zero padding to lane-dense widths + bf16 cast + fc1 weight rearrangement)
# ---------------------------------------------------------------------------
def _uniform(key, shape, scale):
    return jax.random.uniform(key, shape, jnp.float32, -scale, scale)


def make_params(key, dna_emb, prot_emb, conv, drug_kernels, prot_kernels,
                drug_len, prot_len, num_heads):
    E = conv * 4
    keys = iter(jax.random.split(key, 64))

    def conv_stack_params(cin, kernels):
        chans = [cin, conv, conv * 2, conv * 4]
        layers = []
        for i, k in enumerate(kernels):
            fan_in = chans[i] * k
            stdv = 1.0 / math.sqrt(fan_in)
            w = _uniform(next(keys), (k, chans[i], chans[i + 1]), stdv)
            b = _uniform(next(keys), (chans[i + 1],), stdv)
            layers.append((w, b))
        return layers

    drug_convs = conv_stack_params(dna_emb, drug_kernels)
    prot_convs = conv_stack_params(prot_emb, prot_kernels)

    sa = 1.0 / math.sqrt(E)
    mha = dict(
        wq=_uniform(next(keys), (E, E), sa), bq=_uniform(next(keys), (E,), sa),
        wk=_uniform(next(keys), (E, E), sa), bk=_uniform(next(keys), (E,), sa),
        wv=_uniform(next(keys), (E, E), sa), bv=_uniform(next(keys), (E,), sa),
        wo=_uniform(next(keys), (E, E), sa), bo=_uniform(next(keys), (E,), sa),
        num_heads=num_heads,
    )

    F_in = E * (drug_len + prot_len)
    dims = [(F_in, 1024), (1024, 1024), (1024, 512), (512, 2)]
    mlp = {}
    for i, (din, dout) in enumerate(dims, start=1):
        s = 1.0 / math.sqrt(din)
        mlp[f"w{i}"] = _uniform(next(keys), (din, dout), s)
        mlp[f"b{i}"] = _uniform(next(keys), (dout,), s)

    return dict(drug_convs=drug_convs, prot_convs=prot_convs, mha=mha, mlp=mlp)


def prepare_params(params, drug_len, prot_len):
    bf16 = jnp.bfloat16
    E = params["mha"]["wq"].shape[0]
    Ep = _round_up(E, 128)

    def prep_stack(layers):
        out = {"ks": tuple(int(w.shape[0]) for (w, _) in layers)}
        for li, (w, b) in enumerate(layers, start=1):
            K, cin, cout = w.shape
            coutp = _round_up(cout, 128)
            if li == 1:
                wp = jnp.pad(w, ((0, 0), (0, 0), (0, coutp - cout))).astype(bf16)
            else:
                cinp = _round_up(cin, 128)
                wp = jnp.pad(w, ((0, 0), (0, cinp - cin), (0, coutp - cout)))
                wp = wp.reshape(K * cinp, coutp).astype(bf16)
            out[f"w{li}"] = wp
            out[f"b{li}"] = jnp.pad(b, (0, coutp - cout)).reshape(1, coutp)
        return out

    mha = params["mha"]

    def pad_sq(w):
        return jnp.pad(w, ((0, Ep - E), (0, Ep - E))).astype(bf16)

    def pad_vec(v):
        return jnp.pad(v, (0, Ep - E)).reshape(1, Ep).astype(jnp.float32)

    mha_p = dict(
        wq=pad_sq(mha["wq"]), wk=pad_sq(mha["wk"]),
        wv=pad_sq(mha["wv"]), wo=pad_sq(mha["wo"]),
        bq=pad_vec(mha["bq"]), bk=pad_vec(mha["bk"]),
        bv=pad_vec(mha["bv"]), bo=pad_vec(mha["bo"]),
        num_heads=int(mha["num_heads"]), e_true=int(E),
    )

    # fc1 weight: torch flatten order is index = e*(Ld+Lp) + l on the mixed
    # (B, E, Ld+Lp) tensor.  Rearrange to the kernel's (l, e_pad) order so the
    # activation flatten is a pure reshape (no HBM transposes).
    mlp = params["mlp"]
    H1 = mlp["w1"].shape[1]
    Ltot = drug_len + prot_len
    w1r = mlp["w1"].reshape(E, Ltot, H1)
    w1d = jnp.transpose(w1r[:, :drug_len, :], (1, 0, 2))      # (Ld, E, H1)
    w1p = jnp.transpose(w1r[:, drug_len:, :], (1, 0, 2))      # (Lp, E, H1)
    w1d = jnp.pad(w1d, ((0, 0), (0, Ep - E), (0, 0))).reshape(drug_len * Ep, H1)
    w1p = jnp.pad(w1p, ((0, 0), (0, Ep - E), (0, 0))).reshape(prot_len * Ep, H1)
    w1m = jnp.concatenate([w1d, w1p], axis=0)                 # (F_act, H1)
    F_act = Ltot * Ep
    F_pad = _round_up(F_act, MLP_TK)
    w1m = jnp.pad(w1m, ((0, F_pad - F_act), (0, 0))).astype(bf16)

    mlp_p = dict(
        w1=w1m, b1=mlp["b1"].reshape(1, -1),
        w2=mlp["w2"].astype(bf16), b2=mlp["b2"].reshape(1, -1),
        w3=mlp["w3"].astype(bf16), b3=mlp["b3"].reshape(1, -1),
        w4=mlp["w4"].astype(bf16), b4=mlp["b4"].reshape(1, -1),
        tk=MLP_TK,
    )

    return dict(drug_conv=prep_stack(params["drug_convs"]),
                prot_conv=prep_stack(params["prot_convs"]),
                mha=mha_p, mlp=mlp_p)


if __name__ == "__main__":
    # Small, module-consistent shapes.
    B = 2
    drug_len, prot_len = 8, 16          # drug_MAX_LENGH / protein_MAX_LENGH
    dna_emb, prot_emb = 16, 24          # hp.dna_emb_dim / hp.protein_emb_dim (scaled)
    conv = 10                           # hp.conv (scaled; attention_dim = 40)
    drug_kernels = [4, 6, 8]            # hp.drug_kernel
    prot_kernels = [3, 3, 3]            # hp.protein_kernel
    num_heads = 5                       # mix_attention_head

    root = jax.random.PRNGKey(0)
    kp, kd1, kd2 = jax.random.split(root, 3)
    params = make_params(kp, dna_emb, prot_emb, conv, drug_kernels,
                         prot_kernels, drug_len, prot_len, num_heads)
    pp = prepare_params(params, drug_len, prot_len)

    drugembed = jax.random.normal(kd1, (B, drug_len, dna_emb), jnp.float32)
    proteinembed = jax.random.normal(kd2, (B, prot_len, prot_emb), jnp.float32)

    out = mcanet_forward(drugembed, proteinembed, pp)
    out = jax.block_until_ready(out)
    assert out.shape == (B, 2)
    print("KERNEL_OK")
</pallas_src>

<mosaic_0001>
module attributes {stable_mosaic.version = 11 : i64} {
  func.func @conv_stack_kernel(%arg0: i32, %arg1: memref<1x8x16xf32, #tpu.memory_space<vmem>>, %arg2: memref<4x16x128xbf16, #tpu.memory_space<vmem>>, %arg3: memref<1x128xf32, #tpu.memory_space<vmem>>, %arg4: memref<768x128xbf16, #tpu.memory_space<vmem>>, %arg5: memref<1x128xf32, #tpu.memory_space<vmem>>, %arg6: memref<1024x128xbf16, #tpu.memory_space<vmem>>, %arg7: memref<1x128xf32, #tpu.memory_space<vmem>>, %arg8: memref<1x8x128xf32, #tpu.memory_space<vmem>>, %arg9: memref<11x16xf32, #tpu.memory_space<vmem>>, %arg10: memref<13x128xf32, #tpu.memory_space<vmem>>, %arg11: memref<15x128xf32, #tpu.memory_space<vmem>>) attributes {dimension_semantics = [#tpu.dimension_semantics<parallel>], iteration_bounds = array<i64: 2>, scalar_prefetch = 0 : i64, scratch_operands = 3 : i64, tpu.core_type = #tpu.core_type<tc>, window_params = [{transform_indices = @transform_0, window_bounds = array<i64: 1, 8, 16>}, {pipeline_mode = #tpu.pipeline_mode<synchronous>, transform_indices = @transform_1, window_bounds = array<i64: 4, 16, 128>}, {pipeline_mode = #tpu.pipeline_mode<synchronous>, transform_indices = @transform_2, window_bounds = array<i64: 1, 128>}, {pipeline_mode = #tpu.pipeline_mode<synchronous>, transform_indices = @transform_3, window_bounds = array<i64: 768, 128>}, {pipeline_mode = #tpu.pipeline_mode<synchronous>, transform_indices = @transform_4, window_bounds = array<i64: 1, 128>}, {pipeline_mode = #tpu.pipeline_mode<synchronous>, transform_indices = @transform_5, window_bounds = array<i64: 1024, 128>}, {pipeline_mode = #tpu.pipeline_mode<synchronous>, transform_indices = @transform_6, window_bounds = array<i64: 1, 128>}, {transform_indices = @transform_7, window_bounds = array<i64: 1, 8, 128>}]} {
    %c0 = arith.constant 0 : index
    %c0_0 = arith.constant 0 : index
    %c0_1 = arith.constant 0 : index
    %0 = vector.load %arg1[%c0, %c0_0, %c0_1] : memref<1x8x16xf32, #tpu.memory_space<vmem>>, vector<1x8x16xf32>
    %1 = vector.shape_cast %0 : vector<1x8x16xf32> to vector<8x16xf32>
    %cst = arith.constant 0.000000e+00 : f32
    %2 = vector.broadcast %cst : f32 to vector<1x16xf32>
    %c0_2 = arith.constant 0 : index
    %c0_3 = arith.constant 0 : index
    %3 = vector.load %arg9[%c0_2, %c0_3] : memref<11x16xf32, #tpu.memory_space<vmem>>, vector<1x16xf32>
    tpu.vector_store %arg9[%c0_2, %c0_3], %2 {strides = array<i32>} : memref<11x16xf32, #tpu.memory_space<vmem>>, vector<1x16xf32>,
    %cst_4 = arith.constant 0.000000e+00 : f32
    %4 = vector.broadcast %cst_4 : f32 to vector<2x16xf32>
    %c9 = arith.constant 9 : index
    %c0_5 = arith.constant 0 : index
    %5 = vector.load %arg9[%c9, %c0_5] : memref<11x16xf32, #tpu.memory_space<vmem>>, vector<2x16xf32>
    tpu.vector_store %arg9[%c9, %c0_5], %4 {strides = array<i32>} : memref<11x16xf32, #tpu.memory_space<vmem>>, vector<2x16xf32>,
    %c1 = arith.constant 1 : index
    %c0_6 = arith.constant 0 : index
    %6 = vector.load %arg9[%c1, %c0_6] : memref<11x16xf32, #tpu.memory_space<vmem>>, vector<8x16xf32>
    tpu.vector_store %arg9[%c1, %c0_6], %1 {strides = array<i32>} : memref<11x16xf32, #tpu.memory_space<vmem>>, vector<8x16xf32>,
    %cst_7 = arith.constant 0.000000e+00 : f32
    %7 = vector.broadcast %cst_7 : f32 to vector<8x128xf32>
    %c0_8 = arith.constant 0 : index
    %c0_9 = arith.constant 0 : index
    %8 = vector.load %arg9[%c0_8, %c0_9] : memref<11x16xf32, #tpu.memory_space<vmem>>, vector<8x16xf32>
    %9 = arith.truncf %8 : vector<8x16xf32> to vector<8x16xbf16>
    %c0_10 = arith.constant 0 : index
    %c0_11 = arith.constant 0 : index
    %c0_12 = arith.constant 0 : index
    %10 = vector.load %arg2[%c0_10, %c0_11, %c0_12] : memref<4x16x128xbf16, #tpu.memory_space<vmem>>, vector<1x16x128xbf16>
    %11 = vector.shape_cast %10 : vector<1x16x128xbf16> to vector<16x128xbf16>
    %cst_13 = arith.constant dense<0.000000e+00> : vector<8x128xf32>
    %12 = tpu.matmul %9, %11, %cst_13 {dimension_numbers = #tpu.dot_dimension_numbers<[1], [0], [0], [1], [0, 0, 1, 1], [], []>} : vector<8x16xbf16>, vector<16x128xbf16>, vector<8x128xf32> -> vector<8x128xf32>
    %13 = arith.addf %7, %12 : vector<8x128xf32>
    %c1_14 = arith.constant 1 : index
    %c0_15 = arith.constant 0 : index
    %14 = vector.load %arg9[%c1_14, %c0_15] : memref<11x16xf32, #tpu.memory_space<vmem>>, vector<8x16xf32>
    %15 = arith.truncf %14 : vector<8x16xf32> to vector<8x16xbf16>
    %c1_16 = arith.constant 1 : index
    %c0_17 = arith.constant 0 : index
    %c0_18 = arith.constant 0 : index
    %16 = vector.load %arg2[%c1_16, %c0_17, %c0_18] : memref<4x16x128xbf16, #tpu.memory_space<vmem>>, vector<1x16x128xbf16>
    %17 = vector.shape_cast %16 : vector<1x16x128xbf16> to vector<16x128xbf16>
    %cst_19 = arith.constant dense<0.000000e+00> : vector<8x128xf32>
    %18 = tpu.matmul %15, %17, %cst_19 {dimension_numbers = #tpu.dot_dimension_numbers<[1], [0], [0], [1], [0, 0, 1, 1], [], []>} : vector<8x16xbf16>, vector<16x128xbf16>, vector<8x128xf32> -> vector<8x128xf32>
    %19 = arith.addf %13, %18 : vector<8x128xf32>
    %c2 = arith.constant 2 : index
    %c0_20 = arith.constant 0 : index
    %20 = vector.load %arg9[%c2, %c0_20] : memref<11x16xf32, #tpu.memory_space<vmem>>, vector<8x16xf32>
    %21 = arith.truncf %20 : vector<8x16xf32> to vector<8x16xbf16>
    %c2_21 = arith.constant 2 : index
    %c0_22 = arith.constant 0 : index
    %c0_23 = arith.constant 0 : index
    %22 = vector.load %arg2[%c2_21, %c0_22, %c0_23] : memref<4x16x128xbf16, #tpu.memory_space<vmem>>, vector<1x16x128xbf16>
    %23 = vector.shape_cast %22 : vector<1x16x128xbf16> to vector<16x128xbf16>
    %cst_24 = arith.constant dense<0.000000e+00> : vector<8x128xf32>
    %24 = tpu.matmul %21, %23, %cst_24 {dimension_numbers = #tpu.dot_dimension_numbers<[1], [0], [0], [1], [0, 0, 1, 1], [], []>} : vector<8x16xbf16>, vector<16x128xbf16>, vector<8x128xf32> -> vector<8x128xf32>
    %25 = arith.addf %19, %24 : vector<8x128xf32>
    %c3 = arith.constant 3 : index
    %c0_25 = arith.constant 0 : index
    %26 = vector.load %arg9[%c3, %c0_25] : memref<11x16xf32, #tpu.memory_space<vmem>>, vector<8x16xf32>
    %27 = arith.truncf %26 : vector<8x16xf32> to vector<8x16xbf16>
    %c3_26 = arith.constant 3 : index
    %c0_27 = arith.constant 0 : index
    %c0_28 = arith.constant 0 : index
    %28 = vector.load %arg2[%c3_26, %c0_27, %c0_28] : memref<4x16x128xbf16, #tpu.memory_space<vmem>>, vector<1x16x128xbf16>
    %29 = vector.shape_cast %28 : vector<1x16x128xbf16> to vector<16x128xbf16>
    %cst_29 = arith.constant dense<0.000000e+00> : vector<8x128xf32>
    %30 = tpu.matmul %27, %29, %cst_29 {dimension_numbers = #tpu.dot_dimension_numbers<[1], [0], [0], [1], [0, 0, 1, 1], [], []>} : vector<8x16xbf16>, vector<16x128xbf16>, vector<8x128xf32> -> vector<8x128xf32>
    %31 = arith.addf %25, %30 : vector<8x128xf32>
    %c0_30 = arith.constant 0 : index
    %c0_31 = arith.constant 0 : index
    %32 = vector.load %arg3[%c0_30, %c0_31] : memref<1x128xf32, #tpu.memory_space<vmem>>, vector<1x128xf32>
    %33 = vector.broadcast %32 : vector<1x128xf32> to vector<8x128xf32>
    %34 = arith.addf %31, %33 : vector<8x128xf32>
    %cst_32 = arith.constant 0.000000e+00 : f32
    %35 = vector.broadcast %cst_32 : f32 to vector<8x128xf32>
    %36 = arith.maximumf %34, %35 : vector<8x128xf32>
    %cst_33 = arith.constant 0.000000e+00 : f32
    %37 = vector.broadcast %cst_33 : f32 to vector<2x128xf32>
    %c0_34 = arith.constant 0 : index
    %c0_35 = arith.constant 0 : index
    %38 = vector.load %arg10[%c0_34, %c0_35] : memref<13x128xf32, #tpu.memory_space<vmem>>, vector<2x128xf32>
    tpu.vector_store %arg10[%c0_34, %c0_35], %37 {strides = array<i32>} : memref<13x128xf32, #tpu.memory_space<vmem>>, vector<2x128xf32>,
    %cst_36 = arith.constant 0.000000e+00 : f32
    %39 = vector.broadcast %cst_36 : f32 to vector<3x128xf32>
    %c10 = arith.constant 10 : index
    %c0_37 = arith.constant 0 : index
    %40 = vector.load %arg10[%c10, %c0_37] : memref<13x128xf32, #tpu.memory_space<vmem>>, vector<3x128xf32>
    tpu.vector_store %arg10[%c10, %c0_37], %39 {strides = array<i32>} : memref<13x128xf32, #tpu.memory_space<vmem>>, vector<3x128xf32>,
    %c2_38 = arith.constant 2 : index
    %c0_39 = arith.constant 0 : index
    %41 = vector.load %arg10[%c2_38, %c0_39] : memref<13x128xf32, #tpu.memory_space<vmem>>, vector<8x128xf32>
    tpu.vector_store %arg10[%c2_38, %c0_39], %36 {strides = array<i32>} : memref<13x128xf32, #tpu.memory_space<vmem>>, vector<8x128xf32>,
    %c0_40 = arith.constant 0 : index
    %c0_41 = arith.constant 0 : index
    %42 = vector.load %arg10[%c0_40, %c0_41] : memref<13x128xf32, #tpu.memory_space<vmem>>, vector<8x128xf32>
    %c1_42 = arith.constant 1 : index
    %c0_43 = arith.constant 0 : index
    %43 = vector.load %arg10[%c1_42, %c0_43] : memref<13x128xf32, #tpu.memory_space<vmem>>, vector<8x128xf32>
    %c2_44 = arith.constant 2 : index
    %c0_45 = arith.constant 0 : index
    %44 = vector.load %arg10[%c2_44, %c0_45] : memref<13x128xf32, #tpu.memory_space<vmem>>, vector<8x128xf32>
    %c3_46 = arith.constant 3 : index
    %c0_47 = arith.constant 0 : index
    %45 = vector.load %arg10[%c3_46, %c0_47] : memref<13x128xf32, #tpu.memory_space<vmem>>, vector<8x128xf32>
    %c4 = arith.constant 4 : index
    %c0_48 = arith.constant 0 : index
    %46 = vector.load %arg10[%c4, %c0_48] : memref<13x128xf32, #tpu.memory_space<vmem>>, vector<8x128xf32>
    %c5 = arith.constant 5 : index
    %c0_49 = arith.constant 0 : index
    %47 = vector.load %arg10[%c5, %c0_49] : memref<13x128xf32, #tpu.memory_space<vmem>>, vector<8x128xf32>
    %48 = tpu.concatenate %42, %43, %44, %45, %46, %47 in 1 : vector<8x128xf32>, vector<8x128xf32>, vector<8x128xf32>, vector<8x128xf32>, vector<8x128xf32>, vector<8x128xf32> -> vector<8x768xf32>
    %49 = arith.truncf %48 : vector<8x768xf32> to vector<8x768xbf16>
    %c0_50 = arith.constant 0 : index
    %c0_51 = arith.constant 0 : index
    %50 = vector.load %arg4[%c0_50, %c0_51] : memref<768x128xbf16, #tpu.memory_space<vmem>>, vector<768x128xbf16>
    %cst_52 = arith.constant dense<0.000000e+00> : vector<8x128xf32>
    %51 = tpu.matmul %49, %50, %cst_52 {dimension_numbers = #tpu.dot_dimension_numbers<[1], [0], [0], [1], [0, 0, 1, 1], [], []>} : vector<8x768xbf16>, vector<768x128xbf16>, vector<8x128xf32> -> vector<8x128xf32>
    %c0_53 = arith.constant 0 : index
    %c0_54 = arith.constant 0 : index
    %52 = vector.load %arg5[%c0_53, %c0_54] : memref<1x128xf32, #tpu.memory_space<vmem>>, vector<1x128xf32>
    %53 = vector.broadcast %52 : vector<1x128xf32> to vector<8x128xf32>
    %54 = arith.addf %51, %53 : vector<8x128xf32>
    %cst_55 = arith.constant 0.000000e+00 : f32
    %55 = vector.broadcast %cst_55 : f32 to vector<8x128xf32>
    %56 = arith.maximumf %54, %55 : vector<8x128xf32>
    %cst_56 = arith.constant 0.000000e+00 : f32
    %57 = vector.broadcast %cst_56 : f32 to vector<3x128xf32>
    %c0_57 = arith.constant 0 : index
    %c0_58 = arith.constant 0 : index
    %58 = vector.load %arg11[%c0_57, %c0_58] : memref<15x128xf32, #tpu.memory_space<vmem>>, vector<3x128xf32>
    tpu.vector_store %arg11[%c0_57, %c0_58], %57 {strides = array<i32>} : memref<15x128xf32, #tpu.memory_space<vmem>>, vector<3x128xf32>,
    %cst_59 = arith.constant 0.000000e+00 : f32
    %59 = vector.broadcast %cst_59 : f32 to vector<4x128xf32>
    %c11 = arith.constant 11 : index
    %c0_60 = arith.constant 0 : index
    %60 = vector.load %arg11[%c11, %c0_60] : memref<15x128xf32, #tpu.memory_space<vmem>>, vector<4x128xf32>
    tpu.vector_store %arg11[%c11, %c0_60], %59 {strides = array<i32>} : memref<15x128xf32, #tpu.memory_space<vmem>>, vector<4x128xf32>,
    %c3_61 = arith.constant 3 : index
    %c0_62 = arith.constant 0 : index
    %61 = vector.load %arg11[%c3_61, %c0_62] : memref<15x128xf32, #tpu.memory_space<vmem>>, vector<8x128xf32>
    tpu.vector_store %arg11[%c3_61, %c0_62], %56 {strides = array<i32>} : memref<15x128xf32, #tpu.memory_space<vmem>>, vector<8x128xf32>,
    %c0_63 = arith.constant 0 : index
    %c0_64 = arith.constant 0 : index
    %62 = vector.load %arg11[%c0_63, %c0_64] : memref<15x128xf32, #tpu.memory_space<vmem>>, vector<8x128xf32>
    %c1_65 = arith.constant 1 : index
    %c0_66 = arith.constant 0 : index
    %63 = vector.load %arg11[%c1_65, %c0_66] : memref<15x128xf32, #tpu.memory_space<vmem>>, vector<8x128xf32>
    %c2_67 = arith.constant 2 : index
    %c0_68 = arith.constant 0 : index
    %64 = vector.load %arg11[%c2_67, %c0_68] : memref<15x128xf32, #tpu.memory_space<vmem>>, vector<8x128xf32>
    %c3_69 = arith.constant 3 : index
    %c0_70 = arith.constant 0 : index
    %65 = vector.load %arg11[%c3_69, %c0_70] : memref<15x128xf32, #tpu.memory_space<vmem>>, vector<8x128xf32>
    %c4_71 = arith.constant 4 : index
    %c0_72 = arith.constant 0 : index
    %66 = vector.load %arg11[%c4_71, %c0_72] : memref<15x128xf32, #tpu.memory_space<vmem>>, vector<8x128xf32>
    %c5_73 = arith.constant 5 : index
    %c0_74 = arith.constant 0 : index
    %67 = vector.load %arg11[%c5_73, %c0_74] : memref<15x128xf32, #tpu.memory_space<vmem>>, vector<8x128xf32>
    %c6 = arith.constant 6 : index
    %c0_75 = arith.constant 0 : index
    %68 = vector.load %arg11[%c6, %c0_75] : memref<15x128xf32, #tpu.memory_space<vmem>>, vector<8x128xf32>
    %c7 = arith.constant 7 : index
    %c0_76 = arith.constant 0 : index
    %69 = vector.load %arg11[%c7, %c0_76] : memref<15x128xf32, #tpu.memory_space<vmem>>, vector<8x128xf32>
    %70 = tpu.concatenate %62, %63, %64, %65, %66, %67, %68, %69 in 1 : vector<8x128xf32>, vector<8x128xf32>, vector<8x128xf32>, vector<8x128xf32>, vector<8x128xf32>, vector<8x128xf32>, vector<8x128xf32>, vector<8x128xf32> -> vector<8x1024xf32>
    %71 = arith.truncf %70 : vector<8x1024xf32> to vector<8x1024xbf16>
    %c0_77 = arith.constant 0 : index
    %c0_78 = arith.constant 0 : index
    %72 = vector.load %arg6[%c0_77, %c0_78] : memref<1024x128xbf16, #tpu.memory_space<vmem>>, vector<1024x128xbf16>
    %cst_79 = arith.constant dense<0.000000e+00> : vector<8x128xf32>
    %73 = tpu.matmul %71, %72, %cst_79 {dimension_numbers = #tpu.dot_dimension_numbers<[1], [0], [0], [1], [0, 0, 1, 1], [], []>} : vector<8x1024xbf16>, vector<1024x128xbf16>, vector<8x128xf32> -> vector<8x128xf32>
    %c0_80 = arith.constant 0 : index
    %c0_81 = arith.constant 0 : index
    %74 = vector.load %arg7[%c0_80, %c0_81] : memref<1x128xf32, #tpu.memory_space<vmem>>, vector<1x128xf32>
    %75 = vector.broadcast %74 : vector<1x128xf32> to vector<8x128xf32>
    %76 = arith.addf %73, %75 : vector<8x128xf32>
    %cst_82 = arith.constant 0.000000e+00 : f32
    %77 = vector.broadcast %cst_82 : f32 to vector<8x128xf32>
    %78 = arith.maximumf %76, %77 : vector<8x128xf32>
    %c0_83 = arith.constant 0 : index
    %c0_84 = arith.constant 0 : index
    %c0_85 = arith.constant 0 : index
    %79 = vector.load %arg8[%c0_83, %c0_84, %c0_85] : memref<1x8x128xf32, #tpu.memory_space<vmem>>, vector<1x8x128xf32>
    %80 = vector.shape_cast %79 : vector<1x8x128xf32> to vector<8x128xf32>
    %81 = vector.shape_cast %78 : vector<8x128xf32> to vector<1x8x128xf32>
    tpu.vector_store %arg8[%c0_83, %c0_84, %c0_85], %81 {strides = array<i32>} : memref<1x8x128xf32, #tpu.memory_space<vmem>>, vector<1x8x128xf32>,
    return
  }
  func.func @transform_0(%arg0: i32) -> (i32, i32, i32) {
    %c0_i32 = arith.constant 0 : i32
    %c0_i32_0 = arith.constant 0 : i32
    %c0_i32_1 = arith.constant 0 : i32
    return %arg0, %c0_i32, %c0_i32_0 : i32, i32, i32
  }
  func.func @transform_1(%arg0: i32) -> (i32, i32, i32) {
    %c0_i32 = arith.constant 0 : i32
    %c0_i32_0 = arith.constant 0 : i32
    %c0_i32_1 = arith.constant 0 : i32
    %c0_i32_2 = arith.constant 0 : i32
    return %c0_i32, %c0_i32_0, %c0_i32_1 : i32, i32, i32
  }
  func.func @transform_2(%arg0: i32) -> (i32, i32) {
    %c0_i32 = arith.constant 0 : i32
    %c0_i32_0 = arith.constant 0 : i32
    %c0_i32_1 = arith.constant 0 : i32
    return %c0_i32, %c0_i32_0 : i32, i32
  }
  func.func @transform_3(%arg0: i32) -> (i32, i32) {
    %c0_i32 = arith.constant 0 : i32
    %c0_i32_0 = arith.constant 0 : i32
    %c0_i32_1 = arith.constant 0 : i32
    return %c0_i32, %c0_i32_0 : i32, i32
  }
  func.func @transform_4(%arg0: i32) -> (i32, i32) {
    %c0_i32 = arith.constant 0 : i32
    %c0_i32_0 = arith.constant 0 : i32
    %c0_i32_1 = arith.constant 0 : i32
    return %c0_i32, %c0_i32_0 : i32, i32
  }
  func.func @transform_5(%arg0: i32) -> (i32, i32) {
    %c0_i32 = arith.constant 0 : i32
    %c0_i32_0 = arith.constant 0 : i32
    %c0_i32_1 = arith.constant 0 : i32
    return %c0_i32, %c0_i32_0 : i32, i32
  }
  func.func @transform_6(%arg0: i32) -> (i32, i32) {
    %c0_i32 = arith.constant 0 : i32
    %c0_i32_0 = arith.constant 0 : i32
    %c0_i32_1 = arith.constant 0 : i32
    return %c0_i32, %c0_i32_0 : i32, i32
  }
  func.func @transform_7(%arg0: i32) -> (i32, i32, i32) {
    %c0_i32 = arith.constant 0 : i32
    %c0_i32_0 = arith.constant 0 : i32
    %c0_i32_1 = arith.constant 0 : i32
    return %arg0, %c0_i32, %c0_i32_0 : i32, i32, i32
  }
}

</mosaic_0001>

<llo_original>
// kernel: tpu_custom_call.1
$region0: #{tpu_custom_call.1}
  #allocation0 [shape = 'u32[]', space=smem, size = 0x4, offset = 0x4, fixed_abs, tag = 'smem constant byte address 0x4 - core index']
  #allocation1 [shape = 'u32[144,128]{1,0:T(1,128)}', space=vmem, size = 0x12000, scoped, tag = 'internal scratch']
  #allocation2 [shape = 'f32[11,16]{1,0:T(8,128)}', space=vmem, size = 0x2000, scoped, tag = 'scratch operand']
  #allocation3 [shape = 'f32[13,128]{1,0:T(8,128)}', space=vmem, size = 0x2000, scoped, tag = 'scratch operand']
  #allocation4 [shape = 'f32[15,128]{1,0:T(8,128)}', space=vmem, size = 0x2000, scoped, tag = 'scratch operand']
  %s0 = inlined_call_operand.hbm [shape: f32[2,8,16], index: 0, kind: input, shape index: {}]
  %s1 = inlined_call_operand.hbm [shape: bf16[4,16,128], index: 1, kind: input, shape index: {}]
  %s2 = inlined_call_operand.vmem [shape: f32[1,128], index: 2, kind: input, shape index: {}]
  %s3 = inlined_call_operand.hbm [shape: bf16[768,128], index: 3, kind: input, shape index: {}]
  %s4 = inlined_call_operand.vmem [shape: f32[1,128], index: 4, kind: input, shape index: {}]
  %s5 = inlined_call_operand.hbm [shape: bf16[1024,128], index: 5, kind: input, shape index: {}]
  %s6 = inlined_call_operand.vmem [shape: f32[1,128], index: 6, kind: input, shape index: {}]
  %s7 = inlined_call_operand.hbm [shape: f32[2,8,128], index: 7, kind: output, shape index: {}]
  %s8 = sld [smem:[#allocation0]]
  $region77: #{tpu_custom_call.1} parent=0
    _
  %s10 = ssub.s32 1, %s8
  %s11 = scalar_select 0, %s10, %s8
  $region1: #{tpu_custom_call.1} parent=0
    #allocation5 [shape = 'u8[8192]{0}', space=vmem, size = 0x2000, scoped, tag = 'input window, operand 0']
    #allocation6 [shape = 's32[2]{0}', space=sflag, size = 0x8, scoped, tag = 'scoped memory for tpu_custom_call.1']
    #allocation7 [shape = 's32[2]{0}', space=sflag, size = 0x8, scoped, tag = 'scoped memory for tpu_custom_call.1']
    #allocation8 [shape = 'u8[16384]{0}', space=vmem, size = 0x4000, scoped, tag = 'input window, operand 1, single buffered']
    #allocation9 [shape = 's32[1]{0}', space=sflag, size = 0x4, scoped, tag = 'scoped memory for tpu_custom_call.1']
    #allocation10 [shape = 'u8[196608]{0}', space=vmem, size = 0x30000, scoped, tag = 'input window, operand 3, single buffered']
    #allocation11 [shape = 'u8[262144]{0}', space=vmem, size = 0x40000, scoped, tag = 'input window, operand 5, single buffered']
    #allocation12 [shape = 's32[1]{0}', space=sflag, size = 0x4, scoped, tag = 'scoped memory for tpu_custom_call.1']
    #allocation13 [shape = 'u8[8192]{0}', space=vmem, size = 0x2000, scoped, tag = 'output window, operand 0']
    %12 = vsyncpa [#allocation6], 0
    %s13 = scalar_lea.sflag [#allocation6], 1
    %14 = vsyncpa %s13, 0
    %15 = vsyncpa [#allocation9], 0
    %16 = vsyncpa [#allocation12], 0
    %17 = vsyncpa [#allocation7], 0
    %s18 = scalar_lea.sflag [#allocation7], 1
    %19 = vsyncpa %s18, 0
    loop: start=0, step=1, limit=4
    $region2: #{tpu_custom_call.1} parent=1 // loop_pre_header
      _
    $region3: #{tpu_custom_call.1} parent=1 // loop_header
      %s21 = sphi 0, %s25
      %p22 = scmp.ge.s32.totalorder %s21, 4
      %s31 = sphi 0, %s33
      %s34 = sphi 0, %s31
      %s35 = sphi 0, %s34
      %s51 = sphi 0, %s35
      %s55 = sphi 0, %s55
      %s57 = sphi 0, %s55
      %s58 = sphi 0, %s57
      %s72 = sphi 0, %s58
      %s76 = sphi 0, %s76
      %s78 = sphi 0, %s76
      %s79 = sphi 0, %s78
      %s93 = sphi 0, %s79
      %s97 = sphi 0, %s97
      %s99 = sphi 0, %s97
      %s100 = sphi 0, %s99
      %s114 = sphi 0, %s100
      %s118 = sphi 0, %s118
      %s120 = sphi 0, %s118
      %s121 = sphi 0, %s120
      %s135 = sphi 0, %s121
      %s139 = sphi 0, %s139
      %s141 = sphi 0, %s139
      %s142 = sphi 0, %s141
      %s156 = sphi 0, %s142
      %s160 = sphi 0, %s160
      %s162 = sphi 0, %s160
      %s163 = sphi 0, %s162
      %s177 = sphi 0, %s163
      %s183 = sphi 0, %s185
      %s186 = sphi 0, %s183
      %s187 = sphi 0, %s186
      %s203 = sphi 0, %s187
    $region4: #{tpu_custom_call.1} parent=1 // loop_header_branch
      %24 = sbr.rel (%p22) target = $region8
    $region5: #{tpu_custom_call.1} parent=1 // loop_body
      %s26 = ssub.s32 %s21, 1
      %s27 = ssub.s32 %s21, 2
      %s28 = sadd.s32 %s21, 1
      %s29 = ssub.s32 %s21, %s28
      %p30 = scmp.eq.s32.totalorder %s29, 0
      %s32 = sadd.s32 %s31, 1
      %s33 = scalar_select %p30, %s31, %s32
      %p36 = pneg %p30
      %p37 = scmp.eq.s32.totalorder %s21, 1
      %p38 = por %p36, %p37
      %p39 = scmp.ne.s32.totalorder %s31, %s34
      %p40 = scmp.eq.s32.totalorder %s21, 0
      %p41 = por %p39, %p40
      %p42 = scmp.ne.s32.totalorder %s31, %s34
      %p43 = scmp.eq.s32.totalorder %s26, 1
      %p44 = por %p42, %p43
      %p45 = scmp.ne.s32.totalorder %s34, %s35
      %p46 = scmp.eq.s32.totalorder %s26, 0
      %p47 = por %p45, %p46
      %p48 = scmp.ne.s32.totalorder %s34, %s35
      %p49 = scmp.eq.s32.totalorder %s27, 1
      %p50 = por %p48, %p49
      %p52 = scmp.ne.s32.totalorder %s35, %s51
      %p53 = scmp.eq.s32.totalorder %s27, 0
      %p54 = por %p52, %p53
      %s56 = sadd.s32 %s55, 1
      %p59 = scmp.eq.s32.totalorder %s21, 1
      %p60 = scmp.ne.s32.totalorder %s55, %s57
      %p61 = scmp.eq.s32.totalorder %s21, 0
      %p62 = por %p60, %p61
      %p63 = scmp.ne.s32.totalorder %s55, %s57
      %p64 = scmp.eq.s32.totalorder %s26, 1
      %p65 = por %p63, %p64
      %p66 = scmp.ne.s32.totalorder %s57, %s58
      %p67 = scmp.eq.s32.totalorder %s26, 0
      %p68 = por %p66, %p67
      %p69 = scmp.ne.s32.totalorder %s57, %s58
      %p70 = scmp.eq.s32.totalorder %s27, 1
      %p71 = por %p69, %p70
      %p73 = scmp.ne.s32.totalorder %s58, %s72
      %p74 = scmp.eq.s32.totalorder %s27, 0
      %p75 = por %p73, %p74
      %s77 = sadd.s32 %s76, 1
      %p80 = scmp.eq.s32.totalorder %s21, 1
      %p81 = scmp.ne.s32.totalorder %s76, %s78
      %p82 = scmp.eq.s32.totalorder %s21, 0
      %p83 = por %p81, %p82
      %p84 = scmp.ne.s32.totalorder %s76, %s78
      %p85 = scmp.eq.s32.totalorder %s26, 1
      %p86 = por %p84, %p85
      %p87 = scmp.ne.s32.totalorder %s78, %s79
      %p88 = scmp.eq.s32.totalorder %s26, 0
      %p89 = por %p87, %p88
      %p90 = scmp.ne.s32.totalorder %s78, %s79
      %p91 = scmp.eq.s32.totalorder %s27, 1
      %p92 = por %p90, %p91
      %p94 = scmp.ne.s32.totalorder %s79, %s93
      %p95 = scmp.eq.s32.totalorder %s27, 0
      %p96 = por %p94, %p95
      %s98 = sadd.s32 %s97, 1
      %p101 = scmp.eq.s32.totalorder %s21, 1
      %p102 = scmp.ne.s32.totalorder %s97, %s99
      %p103 = scmp.eq.s32.totalorder %s21, 0
      %p104 = por %p102, %p103
      %p105 = scmp.ne.s32.totalorder %s97, %s99
      %p106 = scmp.eq.s32.totalorder %s26, 1
      %p107 = por %p105, %p106
      %p108 = scmp.ne.s32.totalorder %s99, %s100
      %p109 = scmp.eq.s32.totalorder %s26, 0
      %p110 = por %p108, %p109
      %p111 = scmp.ne.s32.totalorder %s99, %s100
      %p112 = scmp.eq.s32.totalorder %s27, 1
      %p113 = por %p111, %p112
      %p115 = scmp.ne.s32.totalorder %s100, %s114
      %p116 = scmp.eq.s32.totalorder %s27, 0
      %p117 = por %p115, %p116
      %s119 = sadd.s32 %s118, 1
      %p122 = scmp.eq.s32.totalorder %s21, 1
      %p123 = scmp.ne.s32.totalorder %s118, %s120
      %p124 = scmp.eq.s32.totalorder %s21, 0
      %p125 = por %p123, %p124
      %p126 = scmp.ne.s32.totalorder %s118, %s120
      %p127 = scmp.eq.s32.totalorder %s26, 1
      %p128 = por %p126, %p127
      %p129 = scmp.ne.s32.totalorder %s120, %s121
      %p130 = scmp.eq.s32.totalorder %s26, 0
      %p131 = por %p129, %p130
      %p132 = scmp.ne.s32.totalorder %s120, %s121
      %p133 = scmp.eq.s32.totalorder %s27, 1
      %p134 = por %p132, %p133
      %p136 = scmp.ne.s32.totalorder %s121, %s135
      %p137 = scmp.eq.s32.totalorder %s27, 0
      %p138 = por %p136, %p137
      %s140 = sadd.s32 %s139, 1
      %p143 = scmp.eq.s32.totalorder %s21, 1
      %p144 = scmp.ne.s32.totalorder %s139, %s141
      %p145 = scmp.eq.s32.totalorder %s21, 0
      %p146 = por %p144, %p145
      %p147 = scmp.ne.s32.totalorder %s139, %s141
      %p148 = scmp.eq.s32.totalorder %s26, 1
      %p149 = por %p147, %p148
      %p150 = scmp.ne.s32.totalorder %s141, %s142
      %p151 = scmp.eq.s32.totalorder %s26, 0
      %p152 = por %p150, %p151
      %p153 = scmp.ne.s32.totalorder %s141, %s142
      %p154 = scmp.eq.s32.totalorder %s27, 1
      %p155 = por %p153, %p154
      %p157 = scmp.ne.s32.totalorder %s142, %s156
      %p158 = scmp.eq.s32.totalorder %s27, 0
      %p159 = por %p157, %p158
      %s161 = sadd.s32 %s160, 1
      %p164 = scmp.eq.s32.totalorder %s21, 1
      %p165 = scmp.ne.s32.totalorder %s160, %s162
      %p166 = scmp.eq.s32.totalorder %s21, 0
      %p167 = por %p165, %p166
      %p168 = scmp.ne.s32.totalorder %s160, %s162
      %p169 = scmp.eq.s32.totalorder %s26, 1
      %p170 = por %p168, %p169
      %p171 = scmp.ne.s32.totalorder %s162, %s163
      %p172 = scmp.eq.s32.totalorder %s26, 0
      %p173 = por %p171, %p172
      %p174 = scmp.ne.s32.totalorder %s162, %s163
      %p175 = scmp.eq.s32.totalorder %s27, 1
      %p176 = por %p174, %p175
      %p178 = scmp.ne.s32.totalorder %s163, %s177
      %p179 = scmp.eq.s32.totalorder %s27, 0
      %p180 = por %p178, %p179
      %s181 = ssub.s32 %s21, %s28
      %p182 = scmp.eq.s32.totalorder %s181, 0
      %s184 = sadd.s32 %s183, 1
      %s185 = scalar_select %p182, %s183, %s184
      %p188 = pneg %p182
      %p189 = scmp.eq.s32.totalorder %s21, 1
      %p190 = por %p188, %p189
      %p191 = scmp.ne.s32.totalorder %s183, %s186
      %p192 = scmp.eq.s32.totalorder %s21, 0
      %p193 = por %p191, %p192
      %p194 = scmp.ne.s32.totalorder %s183, %s186
      %p195 = scmp.eq.s32.totalorder %s26, 1
      %p196 = por %p194, %p195
      %p197 = scmp.ne.s32.totalorder %s186, %s187
      %p198 = scmp.eq.s32.totalorder %s26, 0
      %p199 = por %p197, %p198
      %p200 = scmp.ne.s32.totalorder %s186, %s187
      %p201 = scmp.eq.s32.totalorder %s27, 1
      %p202 = por %p200, %p201
      %p204 = scmp.ne.s32.totalorder %s187, %s203
      %p205 = scmp.eq.s32.totalorder %s27, 0
      %p206 = por %p204, %p205
      %p207 = scmp.le.s32.totalorder 1, %s21
      %p208 = scmp.lt.s32.totalorder %s21, 3
      %p209 = pnand %p207, %p208
      %p210 = pneg %p209
      // Predicated region
      $region9: #{tpu_custom_call.1} parent=5 // pred_check
        _
      $region10: #{tpu_custom_call.1} parent=5 // pred_check_branch
        %212 = sbr.rel (%p209) target = $region12
      $region11: #{tpu_custom_call.1} parent=5 // pred_region
        %s213 = ssub.s32 %s21, 1
        // Predicated region
        $region13: #{tpu_custom_call.1} parent=11 // pred_check
          %p214 = pneg %p68
        $region14: #{tpu_custom_call.1} parent=11 // pred_check_branch
          %216 = sbr.rel (%p214) target = $region16
        $region15: #{tpu_custom_call.1} parent=11 // pred_region
          %s218 = ssub.s32 512, 512
          %219 = vsyncadd [#allocation9], %s218
          %s220 = sshll.u32 [#allocation8], 4
          %s221 = int_to_ptr.vmem [resolvable:$true] %s220
          %226 = dma.hbm_to_vmem [thread:$0]  %s1, 512, %s221, [#allocation9], 64, 64, 4
        $region16: #{tpu_custom_call.1} parent=11 // pred_fallthru
          _
        // Predicated region
        $region17: #{tpu_custom_call.1} parent=11 // pred_check
          %p227 = pneg %p89
        $region18: #{tpu_custom_call.1} parent=11 // pred_check_branch
          %229 = sbr.rel (%p227) target = $region20
        $region19: #{tpu_custom_call.1} parent=11 // pred_region
          _
        $region20: #{tpu_custom_call.1} parent=11 // pred_fallthru
          _
        // Predicated region
        $region21: #{tpu_custom_call.1} parent=11 // pred_check
          %p230 = pneg %p110
        $region22: #{tpu_custom_call.1} parent=11 // pred_check_branch
          %232 = sbr.rel (%p230) target = $region24
        $region23: #{tpu_custom_call.1} parent=11 // pred_region
          %s234 = ssub.s32 6144, 6144
          %235 = vsyncadd [#allocation9], %s234
          %s236 = sshll.u32 [#allocation10], 4
          %s237 = int_to_ptr.vmem [resolvable:$true] %s236
          %242 = dma.hbm_to_vmem [thread:$0]  %s3, 6144, %s237, [#allocation9], 64, 64, 4
        $region24: #{tpu_custom_call.1} parent=11 // pred_fallthru
          _
        // Predicated region
        $region25: #{tpu_custom_call.1} parent=11 // pred_check
          %p243 = pneg %p131
        $region26: #{tpu_custom_call.1} parent=11 // pred_check_branch
          %245 = sbr.rel (%p243) target = $region28
        $region27: #{tpu_custom_call.1} parent=11 // pred_region
          _
        $region28: #{tpu_custom_call.1} parent=11 // pred_fallthru
          _
        // Predicated region
        $region29: #{tpu_custom_call.1} parent=11 // pred_check
          %p246 = pneg %p152
        $region30: #{tpu_custom_call.1} parent=11 // pred_check_branch
          %248 = sbr.rel (%p246) target = $region32
        $region31: #{tpu_custom_call.1} parent=11 // pred_region
          %s250 = ssub.s32 8192, 8192
          %251 = vsyncadd [#allocation12], %s250
          %s252 = sshll.u32 [#allocation11], 4
          %s253 = int_to_ptr.vmem [resolvable:$true] %s252
          %258 = dma.hbm_to_vmem [thread:$0]  %s5, 8192, %s253, [#allocation12], 64, 64, 4
        $region32: #{tpu_custom_call.1} parent=11 // pred_fallthru
          _
        // Predicated region
        $region33: #{tpu_custom_call.1} parent=11 // pred_check
          %p259 = pneg %p173
        $region34: #{tpu_custom_call.1} parent=11 // pred_check_branch
          %261 = sbr.rel (%p259) target = $region36
        $region35: #{tpu_custom_call.1} parent=11 // pred_region
          _
        $region36: #{tpu_custom_call.1} parent=11 // pred_fallthru
          _
      $region12: #{tpu_custom_call.1} parent=5 // pred_fallthru
        _
      %p262 = scmp.lt.s32.totalorder %s21, 2
      // Predicated region
      $region37: #{tpu_custom_call.1} parent=5 // pred_check
        %p263 = pneg %p262
      $region38: #{tpu_custom_call.1} parent=5 // pred_check_branch
        %265 = sbr.rel (%p263) target = $region40
      $region39: #{tpu_custom_call.1} parent=5 // pred_region
        // Predicated region
        $region41: #{tpu_custom_call.1} parent=39 // pred_check
          %p266 = pneg %p41
        $region42: #{tpu_custom_call.1} parent=39 // pred_check_branch
          %268 = sbr.rel (%p266) target = $region44
        $region43: #{tpu_custom_call.1} parent=39 // pred_region
          %s269 = sand.u32 %s31, 1
          %s270 = scalar_lea.sflag [#allocation6], %s269
          %s271 = sand.u32 %s31, 1
          %s272 = smul.addr %s271, 8
          %s273 = scalar_lea.vmem [#allocation5], %s272
          %s275 = ssub.s32 128, 128
          %276 = vsyncadd %s270, %s275
          %s277 = smul.addr %s21, 128
          %s278 = scalar_lea.hbm %s0, %s277
          %s280 = sshll.u32 %s273, 4
          %s281 = int_to_ptr.vmem [resolvable:$true] %s280
          %283 = dma.hbm_to_vmem [thread:$0]  %s278, 128, %s281, %s270
        $region44: #{tpu_custom_call.1} parent=39 // pred_fallthru
          _
      $region40: #{tpu_custom_call.1} parent=5 // pred_fallthru
        _
      %p284 = scmp.le.s32.totalorder 1, %s21
      %p285 = scmp.lt.s32.totalorder %s21, 3
      %p286 = pnand %p284, %p285
      %p287 = pneg %p286
      // Predicated region
      $region45: #{tpu_custom_call.1} parent=5 // pred_check
        _
      $region46: #{tpu_custom_call.1} parent=5 // pred_check_branch
        %289 = sbr.rel (%p286) target = $region48
      $region47: #{tpu_custom_call.1} parent=5 // pred_region
        %s290 = ssub.s32 %s21, 1
        %s291 = sand.u32 %s34, 1
        %s292 = scalar_lea.sflag [#allocation6], %s291
        %s293 = sand.u32 %s34, 1
        %s294 = smul.addr %s293, 8
        %s295 = scalar_lea.vmem [#allocation5], %s294
        // Predicated region
        $region49: #{tpu_custom_call.1} parent=47 // pred_check
          %p296 = pneg %p47
        $region50: #{tpu_custom_call.1} parent=47 // pred_check_branch
          %298 = sbr.rel (%p296) target = $region52
        $region51: #{tpu_custom_call.1} parent=47 // pred_region
          %299 = dma.done %s292, 128
        $region52: #{tpu_custom_call.1} parent=47 // pred_fallthru
          _
        // Predicated region
        $region53: #{tpu_custom_call.1} parent=47 // pred_check
          %p300 = pneg %p68
        $region54: #{tpu_custom_call.1} parent=47 // pred_check_branch
          %302 = sbr.rel (%p300) target = $region56
        $region55: #{tpu_custom_call.1} parent=47 // pred_region
          %303 = dma.done [#allocation9], 512
        $region56: #{tpu_custom_call.1} parent=47 // pred_fallthru
          _
        // Predicated region
        $region57: #{tpu_custom_call.1} parent=47 // pred_check
          %p304 = pneg %p110
        $region58: #{tpu_custom_call.1} parent=47 // pred_check_branch
          %306 = sbr.rel (%p304) target = $region60
        $region59: #{tpu_custom_call.1} parent=47 // pred_region
          %307 = dma.done [#allocation9], 6144
        $region60: #{tpu_custom_call.1} parent=47 // pred_fallthru
          _
        // Predicated region
        $region61: #{tpu_custom_call.1} parent=47 // pred_check
          %p308 = pneg %p152
        $region62: #{tpu_custom_call.1} parent=47 // pred_check_branch
          %310 = sbr.rel (%p308) target = $region64
        $region63: #{tpu_custom_call.1} parent=47 // pred_region
          %311 = dma.done [#allocation12], 8192
        $region64: #{tpu_custom_call.1} parent=47 // pred_fallthru
          _
        %s312 = sand.u32 %s34, 1
        %s313 = scalar_lea.sflag [#allocation6], %s312
        %s314 = sand.u32 %s34, 1
        %s315 = smul.addr %s314, 8
        %s316 = scalar_lea.vmem [#allocation5], %s315
        %p317 = pneg %p47
        %p318 = pneg %p44
        %p319 = pneg %p68
        %p320 = pneg %p65
        %p321 = pneg %p89
        %p322 = pneg %p86
        %p323 = pneg %p110
        %p324 = pneg %p107
        %p325 = pneg %p131
        %p326 = pneg %p128
        %p327 = pneg %p152
        %p328 = pneg %p149
        %p329 = pneg %p173
        %p330 = pneg %p170
        %p331 = pneg %p199
        %p332 = pneg %p196
        %s333 = sand.u32 %s186, 1
        %s334 = scalar_lea.sflag [#allocation7], %s333
        %s335 = sand.u32 %s186, 1
        %s336 = smul.addr %s335, 8
        %s337 = scalar_lea.vmem [#allocation13], %s336
        %v339 = vld [vmem:[%s295] sm:$0xff]
        %vm340 = vcmask 122880
        %341 = vst.msk [vmem:[#allocation2] sm:$0x1] %vm340, 0.0
        %vm342 = vcmask 123904
        %343 = vst.msk [vmem:[#allocation2 + $0x9] sm:$0x3] %vm342, 0.0
        %vm344 = vcmask 130048
        %345 = vst.msk [vmem:[#allocation2 + $0x1] sm:$0xff] %vm344, %v339
        %v346 = vld [vmem:[#allocation2] sm:$0xff]
        %v347 = vpack.c.bf16 %v346, %v346
        %v348 = vld [vmem:[#allocation8] sm:$0xf]
        %v349 = vld [vmem:[#allocation8 + $0x4] sm:$0xf]
        %v350 = vld [vmem:[#allocation2 + $0x1] sm:$0xff]
        %v351 = vpack.c.bf16 %v350, %v350
        %s352 = scalar_lea.vmem [#allocation8], 8
        %v353 = vld [vmem:[%s352] sm:$0xf]
        %v354 = vld [vmem:[%s352 + $0x4] sm:$0xf]
        %v357 = vunpack.c.l.b16 %v353
        %v358 = vunpack.c.l.b16 %v354
        %v359 = vpack.c.b16 %v358, %v357
        %v362 = vsel %vm344, %v351, 0
        %364 = vmatprep.subr.bf16.mxu0 0
        %365 = vmatpush1.bf16.msra.mxu0 %v359
        %366 = vmatprep.subr.bf16.mxu0 0
        %367 = vmatpush1.bf16.msra.mxu0 0
        %368 = vmatprep.subr.bf16.mxu0 0
        %369 = vmatpush1.bf16.msra.mxu0 0
        %370 = vmatprep.subr.bf16.mxu0 0
        %371 = vmatpush1.bf16.msra.mxu0 0
        %372 = vmatprep.subr.bf16.mxu0 0
        %373 = vmatpush1.bf16.msra.mxu0 0
        %374 = vmatprep.subr.bf16.mxu0 0
        %375 = vmatpush1.bf16.msra.mxu0 0
        %376 = vmatprep.subr.bf16.mxu0 0
        %377 = vmatpush1.bf16.msra.mxu0 0
        %378 = vmatprep.subr.bf16.mxu0 0
        %379 = vmatpush1.bf16.msra.mxu0 0
        %380 = vmatprep.subr.bf16.mxu0 0
        %381 = vmatpush1.bf16.msra.mxu0 0
        %382 = vmatprep.subr.bf16.mxu0 0
        %383 = vmatpush1.bf16.msra.mxu0 0
        %384 = vmatprep.subr.bf16.mxu0 0
        %385 = vmatpush1.bf16.msra.mxu0 0
        %386 = vmatprep.subr.bf16.mxu0 0
        %387 = vmatpush1.bf16.msra.mxu0 0
        %388 = vmatprep.subr.bf16.mxu0 0
        %389 = vmatpush1.bf16.msra.mxu0 0
        %390 = vmatprep.subr.bf16.mxu0 0
        %391 = vmatpush1.bf16.msra.mxu0 0
        %392 = vmatprep.subr.bf16.mxu0 0
        %393 = vmatpush1.bf16.msra.mxu0 0
        %394 = vmatprep.subr.bf16.mxu0 0
        %395 = vmatpush1.bf16.msra.mxu0 0
        %396 = vmatprep.mubr.bf16.mxu0 0
        %397 = vmatmul.mubr.bf16.gmra.mrb[0].mxu0 %v362
        %v398 = vpop.f32.mrb[0].mxu0
        %v399 = vadd.f32 0.0, %v398
        %v400 = vpop.f32.mrb[0].mxu0
        %v401 = vpop.f32.mrb[0].mxu0
        %v402 = vpop.f32.mrb[0].mxu0
        %403 = vdwg.mxu0
        %v406 = vunpack.c.l.b16 %v348
        %v407 = vunpack.c.l.b16 %v349
        %v408 = vpack.c.b16 %v407, %v406
        %v411 = vsel %vm344, %v347, 0
        %413 = vmatprep.subr.bf16.mxu0 0
        %414 = vmatpush1.bf16.msra.mxu0 %v408
        %415 = vmatprep.subr.bf16.mxu0 0
        %416 = vmatpush1.bf16.msra.mxu0 0
        %417 = vmatprep.subr.bf16.mxu0 0
        %418 = vmatpush1.bf16.msra.mxu0 0
        %419 = vmatprep.subr.bf16.mxu0 0
        %420 = vmatpush1.bf16.msra.mxu0 0
        %421 = vmatprep.subr.bf16.mxu0 0
        %422 = vmatpush1.bf16.msra.mxu0 0
        %423 = vmatprep.subr.bf16.mxu0 0
        %424 = vmatpush1.bf16.msra.mxu0 0
        %425 = vmatprep.subr.bf16.mxu0 0
        %426 = vmatpush1.bf16.msra.mxu0 0
        %427 = vmatprep.subr.bf16.mxu0 0
        %428 = vmatpush1.bf16.msra.mxu0 0
        %429 = vmatprep.subr.bf16.mxu0 0
        %430 = vmatpush1.bf16.msra.mxu0 0
        %431 = vmatprep.subr.bf16.mxu0 0
        %432 = vmatpush1.bf16.msra.mxu0 0
        %433 = vmatprep.subr.bf16.mxu0 0
        %434 = vmatpush1.bf16.msra.mxu0 0
        %435 = vmatprep.subr.bf16.mxu0 0
        %436 = vmatpush1.bf16.msra.mxu0 0
        %437 = vmatprep.subr.bf16.mxu0 0
        %438 = vmatpush1.bf16.msra.mxu0 0
        %439 = vmatprep.subr.bf16.mxu0 0
        %440 = vmatpush1.bf16.msra.mxu0 0
        %441 = vmatprep.subr.bf16.mxu0 0
        %442 = vmatpush1.bf16.msra.mxu0 0
        %443 = vmatprep.subr.bf16.mxu0 0
        %444 = vmatpush1.bf16.msra.mxu0 0
        %445 = vmatprep.mubr.bf16.mxu0 0
        %446 = vmatmul.mubr.bf16.gmra.mrb[0].mxu0 %v411
        %v447 = vpop.f32.mrb[0].mxu0
        %v448 = vadd.f32 %v399, %v447
        %v449 = vpop.f32.mrb[0].mxu0
        %v450 = vpop.f32.mrb[0].mxu0
        %v451 = vpop.f32.mrb[0].mxu0
        %452 = vdwg.mxu0
        %v453 = vld [vmem:[#allocation2 + $0x2] sm:$0xff]
        %v454 = vpack.c.bf16 %v453, %v453
        %s455 = scalar_lea.vmem [#allocation8], 16
        %v456 = vld [vmem:[%s455] sm:$0xf]
        %v457 = vld [vmem:[%s455 + $0x4] sm:$0xf]
        %v460 = vunpack.c.l.b16 %v456
        %v461 = vunpack.c.l.b16 %v457
        %v462 = vpack.c.b16 %v461, %v460
        %v465 = vsel %vm344, %v454, 0
        %467 = vmatprep.subr.bf16.mxu0 0
        %468 = vmatpush1.bf16.msra.mxu0 %v462
        %469 = vmatprep.subr.bf16.mxu0 0
        %470 = vmatpush1.bf16.msra.mxu0 0
        %471 = vmatprep.subr.bf16.mxu0 0
        %472 = vmatpush1.bf16.msra.mxu0 0
        %473 = vmatprep.subr.bf16.mxu0 0
        %474 = vmatpush1.bf16.msra.mxu0 0
        %475 = vmatprep.subr.bf16.mxu0 0
        %476 = vmatpush1.bf16.msra.mxu0 0
        %477 = vmatprep.subr.bf16.mxu0 0
        %478 = vmatpush1.bf16.msra.mxu0 0
        %479 = vmatprep.subr.bf16.mxu0 0
        %480 = vmatpush1.bf16.msra.mxu0 0
        %481 = vmatprep.subr.bf16.mxu0 0
        %482 = vmatpush1.bf16.msra.mxu0 0
        %483 = vmatprep.subr.bf16.mxu0 0
        %484 = vmatpush1.bf16.msra.mxu0 0
        %485 = vmatprep.subr.bf16.mxu0 0
        %486 = vmatpush1.bf16.msra.mxu0 0
        %487 = vmatprep.subr.bf16.mxu0 0
        %488 = vmatpush1.bf16.msra.mxu0 0
        %489 = vmatprep.subr.bf16.mxu0 0
        %490 = vmatpush1.bf16.msra.mxu0 0
        %491 = vmatprep.subr.bf16.mxu0 0
        %492 = vmatpush1.bf16.msra.mxu0 0
        %493 = vmatprep.subr.bf16.mxu0 0
        %494 = vmatpush1.bf16.msra.mxu0 0
        %495 = vmatprep.subr.bf16.mxu0 0
        %496 = vmatpush1.bf16.msra.mxu0 0
        %497 = vmatprep.subr.bf16.mxu0 0
        %498 = vmatpush1.bf16.msra.mxu0 0
        %499 = vmatprep.mubr.bf16.mxu0 0
        %500 = vmatmul.mubr.bf16.gmra.mrb[0].mxu0 %v465
        %v501 = vpop.f32.mrb[0].mxu0
        %v502 = vadd.f32 0.0, %v501
        %v503 = vpop.f32.mrb[0].mxu0
        %v504 = vpop.f32.mrb[0].mxu0
        %v505 = vpop.f32.mrb[0].mxu0
        %506 = vdwg.mxu0
        %v507 = vadd.f32 %v448, %v502
        %v508 = vld [vmem:[#allocation2 + $0x3] sm:$0xff]
        %v509 = vpack.c.bf16 %v508, %v508
        %s510 = scalar_lea.vmem [#allocation8], 24
        %v511 = vld [vmem:[%s510] sm:$0xf]
        %v512 = vld [vmem:[%s510 + $0x4] sm:$0xf]
        %v515 = vunpack.c.l.b16 %v511
        %v516 = vunpack.c.l.b16 %v512
        %v517 = vpack.c.b16 %v516, %v515
        %v520 = vsel %vm344, %v509, 0
        %522 = vmatprep.subr.bf16.mxu0 0
        %523 = vmatpush1.bf16.msra.mxu0 %v517
        %524 = vmatprep.subr.bf16.mxu0 0
        %525 = vmatpush1.bf16.msra.mxu0 0
        %526 = vmatprep.subr.bf16.mxu0 0
        %527 = vmatpush1.bf16.msra.mxu0 0
        %528 = vmatprep.subr.bf16.mxu0 0
        %529 = vmatpush1.bf16.msra.mxu0 0
        %530 = vmatprep.subr.bf16.mxu0 0
        %531 = vmatpush1.bf16.msra.mxu0 0
        %532 = vmatprep.subr.bf16.mxu0 0
        %533 = vmatpush1.bf16.msra.mxu0 0
        %534 = vmatprep.subr.bf16.mxu0 0
        %535 = vmatpush1.bf16.msra.mxu0 0
        %536 = vmatprep.subr.bf16.mxu0 0
        %537 = vmatpush1.bf16.msra.mxu0 0
        %538 = vmatprep.subr.bf16.mxu0 0
        %539 = vmatpush1.bf16.msra.mxu0 0
        %540 = vmatprep.subr.bf16.mxu0 0
        %541 = vmatpush1.bf16.msra.mxu0 0
        %542 = vmatprep.subr.bf16.mxu0 0
        %543 = vmatpush1.bf16.msra.mxu0 0
        %544 = vmatprep.subr.bf16.mxu0 0
        %545 = vmatpush1.bf16.msra.mxu0 0
        %546 = vmatprep.subr.bf16.mxu0 0
        %547 = vmatpush1.bf16.msra.mxu0 0
        %548 = vmatprep.subr.bf16.mxu0 0
        %549 = vmatpush1.bf16.msra.mxu0 0
        %550 = vmatprep.subr.bf16.mxu0 0
        %551 = vmatpush1.bf16.msra.mxu0 0
        %552 = vmatprep.subr.bf16.mxu0 0
        %553 = vmatpush1.bf16.msra.mxu0 0
        %554 = vmatprep.mubr.bf16.mxu0 0
        %555 = vmatmul.mubr.bf16.gmra.mrb[0].mxu0 %v520
        %v556 = vpop.f32.mrb[0].mxu0
        %v557 = vadd.f32 0.0, %v556
        %v558 = vpop.f32.mrb[0].mxu0
        %v559 = vpop.f32.mrb[0].mxu0
        %v560 = vpop.f32.mrb[0].mxu0
        %561 = vdwg.mxu0
        %v562 = vadd.f32 %v507, %v557
        %v563 = vld [vmem:[%s2] sm:$0x1]
        %v565 = vlaneseq
        %v566 = vshrl.u32 %v565, 7
        %v567 = vsub.s32 0, %v566
        %v568 = vrot.slane %v563, %v567
        %v570 = vadd.f32 %v562, %v568
        %v571 = vmax.f32 %v570, 0.0
        %572 = vst [vmem:[#allocation3] sm:$0x3] 0.0
        %573 = vst [vmem:[#allocation3 + $0xa] sm:$0x7] 0.0
        %574 = vst [vmem:[#allocation3 + $0x2] sm:$0xff] %v571
        %v575 = vld [vmem:[#allocation3] sm:$0xff]
        %v576 = vld [vmem:[#allocation3 + $0x1] sm:$0xff]
        %v577 = vld [vmem:[#allocation3 + $0x2] sm:$0xff]
        %v578 = vld [vmem:[#allocation3 + $0x3] sm:$0xff]
        %v579 = vld [vmem:[#allocation3 + $0x4] sm:$0xff]
        %v580 = vld [vmem:[#allocation3 + $0x5] sm:$0xff]
        %v581 = vpack.c.bf16 %v575, %v575
        %v582 = vpack.c.bf16 %v576, %v576
        %v583 = vpack.c.bf16 %v577, %v577
        %v584 = vpack.c.bf16 %v578, %v578
        %v585 = vpack.c.bf16 %v579, %v579
        %v586 = vpack.c.bf16 %v580, %v580
        %v587 = vld [vmem:[#allocation10] sm:$0xf]
        %v588 = vld [vmem:[#allocation10 + $0x4] sm:$0xf]
        %v589 = vld [vmem:[#allocation10 + $0x8] sm:$0xf]
        %v590 = vld [vmem:[#allocation10 + $0xc] sm:$0xf]
        %v591 = vld [vmem:[#allocation10 + $0x10] sm:$0xf]
        %v592 = vld [vmem:[#allocation10 + $0x14] sm:$0xf]
        %v593 = vld [vmem:[#allocation10 + $0x18] sm:$0xf]
        %v594 = vld [vmem:[#allocation10 + $0x1c] sm:$0xf]
        %v595 = vld [vmem:[#allocation10 + $0x20] sm:$0xf]
        %v596 = vld [vmem:[#allocation10 + $0x24] sm:$0xf]
        %v597 = vld [vmem:[#allocation10 + $0x28] sm:$0xf]
        %v598 = vld [vmem:[#allocation10 + $0x2c] sm:$0xf]
        %v599 = vld [vmem:[#allocation10 + $0x30] sm:$0xf]
        %v600 = vld [vmem:[#allocation10 + $0x34] sm:$0xf]
        %v601 = vld [vmem:[#allocation10 + $0x38] sm:$0xf]
        %v602 = vld [vmem:[#allocation10 + $0x3c] sm:$0xf]
        %v603 = vld [vmem:[#allocation10 + $0x40] sm:$0xf]
        %v604 = vld [vmem:[#allocation10 + $0x44] sm:$0xf]
        %v605 = vld [vmem:[#allocation10 + $0x48] sm:$0xf]
        %v606 = vld [vmem:[#allocation10 + $0x4c] sm:$0xf]
        %v607 = vld [vmem:[#allocation10 + $0x50] sm:$0xf]
        %v608 = vld [vmem:[#allocation10 + $0x54] sm:$0xf]
        %v609 = vld [vmem:[#allocation10 + $0x58] sm:$0xf]
        %v610 = vld [vmem:[#allocation10 + $0x5c] sm:$0xf]
        %v611 = vld [vmem:[#allocation10 + $0x60] sm:$0xf]
        %v612 = vld [vmem:[#allocation10 + $0x64] sm:$0xf]
        %v613 = vld [vmem:[#allocation10 + $0x68] sm:$0xf]
        %v614 = vld [vmem:[#allocation10 + $0x6c] sm:$0xf]
        %v615 = vld [vmem:[#allocation10 + $0x70] sm:$0xf]
        %v616 = vld [vmem:[#allocation10 + $0x74] sm:$0xf]
        %v617 = vld [vmem:[#allocation10 + $0x78] sm:$0xf]
        %v618 = vld [vmem:[#allocation10 + $0x7c] sm:$0xf]
        %v619 = vld [vmem:[#allocation10 + $0x80] sm:$0xf]
        %v620 = vld [vmem:[#allocation10 + $0x84] sm:$0xf]
        %v621 = vld [vmem:[#allocation10 + $0x88] sm:$0xf]
        %v622 = vld [vmem:[#allocation10 + $0x8c] sm:$0xf]
        %v623 = vld [vmem:[#allocation10 + $0x90] sm:$0xf]
        %v624 = vld [vmem:[#allocation10 + $0x94] sm:$0xf]
        %v625 = vld [vmem:[#allocation10 + $0x98] sm:$0xf]
        %v626 = vld [vmem:[#allocation10 + $0x9c] sm:$0xf]
        %v627 = vld [vmem:[#allocation10 + $0xa0] sm:$0xf]
        %v628 = vld [vmem:[#allocation10 + $0xa4] sm:$0xf]
        %v629 = vld [vmem:[#allocation10 + $0xa8] sm:$0xf]
        %v630 = vld [vmem:[#allocation10 + $0xac] sm:$0xf]
        %v631 = vld [vmem:[#allocation10 + $0xb0] sm:$0xf]
        %v632 = vld [vmem:[#allocation10 + $0xb4] sm:$0xf]
        %v633 = vld [vmem:[#allocation10 + $0xb8] sm:$0xf]
        %v634 = vld [vmem:[#allocation10 + $0xbc] sm:$0xf]
        %v635 = vld [vmem:[#allocation10 + $0xc0] sm:$0xf]
        %v636 = vld [vmem:[#allocation10 + $0xc4] sm:$0xf]
        %v637 = vld [vmem:[#allocation10 + $0xc8] sm:$0xf]
        %v638 = vld [vmem:[#allocation10 + $0xcc] sm:$0xf]
        %v639 = vld [vmem:[#allocation10 + $0xd0] sm:$0xf]
        %v640 = vld [vmem:[#allocation10 + $0xd4] sm:$0xf]
        %v641 = vld [vmem:[#allocation10 + $0xd8] sm:$0xf]
        %v642 = vld [vmem:[#allocation10 + $0xdc] sm:$0xf]
        %v643 = vld [vmem:[#allocation10 + $0xe0] sm:$0xf]
        %v644 = vld [vmem:[#allocation10 + $0xe4] sm:$0xf]
        %v645 = vld [vmem:[#allocation10 + $0xe8] sm:$0xf]
        %v646 = vld [vmem:[#allocation10 + $0xec] sm:$0xf]
        %v647 = vld [vmem:[#allocation10 + $0xf0] sm:$0xf]
        %v648 = vld [vmem:[#allocation10 + $0xf4] sm:$0xf]
        %v649 = vld [vmem:[#allocation10 + $0xf8] sm:$0xf]
        %v650 = vld [vmem:[#allocation10 + $0xfc] sm:$0xf]
        %v651 = vld [vmem:[#allocation10 + $0x100] sm:$0xf]
        %v652 = vld [vmem:[#allocation10 + $0x104] sm:$0xf]
        %v653 = vld [vmem:[#allocation10 + $0x108] sm:$0xf]
        %v654 = vld [vmem:[#allocation10 + $0x10c] sm:$0xf]
        %v655 = vld [vmem:[#allocation10 + $0x110] sm:$0xf]
        %v656 = vld [vmem:[#allocation10 + $0x114] sm:$0xf]
        %v657 = vld [vmem:[#allocation10 + $0x118] sm:$0xf]
        %v658 = vld [vmem:[#allocation10 + $0x11c] sm:$0xf]
        %v659 = vld [vmem:[#allocation10 + $0x120] sm:$0xf]
        %v660 = vld [vmem:[#allocation10 + $0x124] sm:$0xf]
        %v661 = vld [vmem:[#allocation10 + $0x128] sm:$0xf]
        %v662 = vld [vmem:[#allocation10 + $0x12c] sm:$0xf]
        %v663 = vld [vmem:[#allocation10 + $0x130] sm:$0xf]
        %v664 = vld [vmem:[#allocation10 + $0x134] sm:$0xf]
        %v665 = vld [vmem:[#allocation10 + $0x138] sm:$0xf]
        %v666 = vld [vmem:[#allocation10 + $0x13c] sm:$0xf]
        %v667 = vld [vmem:[#allocation10 + $0x140] sm:$0xf]
        %v668 = vld [vmem:[#allocation10 + $0x144] sm:$0xf]
        %v669 = vld [vmem:[#allocation10 + $0x148] sm:$0xf]
        %v670 = vld [vmem:[#allocation10 + $0x14c] sm:$0xf]
        %v671 = vld [vmem:[#allocation10 + $0x150] sm:$0xf]
        %v672 = vld [vmem:[#allocation10 + $0x154] sm:$0xf]
        %v673 = vld [vmem:[#allocation10 + $0x158] sm:$0xf]
        %v674 = vld [vmem:[#allocation10 + $0x15c] sm:$0xf]
        %v675 = vld [vmem:[#allocation10 + $0x160] sm:$0xf]
        %v676 = vld [vmem:[#allocation10 + $0x164] sm:$0xf]
        %v677 = vld [vmem:[#allocation10 + $0x168] sm:$0xf]
        %v678 = vld [vmem:[#allocation10 + $0x16c] sm:$0xf]
        %v679 = vld [vmem:[#allocation10 + $0x170] sm:$0xf]
        %v680 = vld [vmem:[#allocation10 + $0x174] sm:$0xf]
        %v681 = vld [vmem:[#allocation10 + $0x178] sm:$0xf]
        %v682 = vld [vmem:[#allocation10 + $0x17c] sm:$0xf]
        %v683 = vld [vmem:[%s4] sm:$0x1]
        %v685 = vlaneseq
        %v686 = vshrl.u32 %v685, 7
        %v687 = vsub.s32 0, %v686
        %v688 = vrot.slane %v683, %v687
        %v786 = vunpack.c.l.b16 %v587
        %v787 = vunpack.c.l.b16 %v588
        %v788 = vunpack.c.l.b16 %v589
        %v789 = vunpack.c.l.b16 %v590
        %v790 = vunpack.c.l.b16 %v591
        %v791 = vunpack.c.l.b16 %v592
        %v792 = vunpack.c.l.b16 %v593
        %v793 = vunpack.c.l.b16 %v594
        %v794 = vunpack.c.l.b16 %v595
        %v795 = vunpack.c.l.b16 %v596
        %v796 = vunpack.c.l.b16 %v597
        %v797 = vunpack.c.l.b16 %v598
        %v798 = vunpack.c.l.b16 %v599
        %v799 = vunpack.c.l.b16 %v600
        %v800 = vunpack.c.l.b16 %v601
        %v801 = vunpack.c.l.b16 %v602
        %v802 = vunpack.c.l.b16 %v603
        %v803 = vunpack.c.l.b16 %v604
        %v804 = vunpack.c.l.b16 %v605
        %v805 = vunpack.c.l.b16 %v606
        %v806 = vunpack.c.l.b16 %v607
        %v807 = vunpack.c.l.b16 %v608
        %v808 = vunpack.c.l.b16 %v609
        %v809 = vunpack.c.l.b16 %v610
        %v810 = vunpack.c.l.b16 %v611
        %v811 = vunpack.c.l.b16 %v612
        %v812 = vunpack.c.l.b16 %v613
        %v813 = vunpack.c.l.b16 %v614
        %v814 = vunpack.c.l.b16 %v615
        %v815 = vunpack.c.l.b16 %v616
        %v816 = vunpack.c.l.b16 %v617
        %v817 = vunpack.c.l.b16 %v618
        %v818 = vunpack.c.l.b16 %v619
        %v819 = vunpack.c.l.b16 %v620
        %v820 = vunpack.c.l.b16 %v621
        %v821 = vunpack.c.l.b16 %v622
        %v822 = vunpack.c.l.b16 %v623
        %v823 = vunpack.c.l.b16 %v624
        %v824 = vunpack.c.l.b16 %v625
        %v825 = vunpack.c.l.b16 %v626
        %v826 = vunpack.c.l.b16 %v627
        %v827 = vunpack.c.l.b16 %v628
        %v828 = vunpack.c.l.b16 %v629
        %v829 = vunpack.c.l.b16 %v630
        %v830 = vunpack.c.l.b16 %v631
        %v831 = vunpack.c.l.b16 %v632
        %v832 = vunpack.c.l.b16 %v633
        %v833 = vunpack.c.l.b16 %v634
        %v834 = vunpack.c.l.b16 %v635
        %v835 = vunpack.c.l.b16 %v636
        %v836 = vunpack.c.l.b16 %v637
        %v837 = vunpack.c.l.b16 %v638
        %v838 = vunpack.c.l.b16 %v639
        %v839 = vunpack.c.l.b16 %v640
        %v840 = vunpack.c.l.b16 %v641
        %v841 = vunpack.c.l.b16 %v642
        %v842 = vunpack.c.l.b16 %v643
        %v843 = vunpack.c.l.b16 %v644
        %v844 = vunpack.c.l.b16 %v645
        %v845 = vunpack.c.l.b16 %v646
        %v846 = vunpack.c.l.b16 %v647
        %v847 = vunpack.c.l.b16 %v648
        %v848 = vunpack.c.l.b16 %v649
        %v849 = vunpack.c.l.b16 %v650
        %v850 = vunpack.c.l.b16 %v651
        %v851 = vunpack.c.l.b16 %v652
        %v852 = vunpack.c.l.b16 %v653
        %v853 = vunpack.c.l.b16 %v654
        %v854 = vunpack.c.l.b16 %v655
        %v855 = vunpack.c.l.b16 %v656
        %v856 = vunpack.c.l.b16 %v657
        %v857 = vunpack.c.l.b16 %v658
        %v858 = vunpack.c.l.b16 %v659
        %v859 = vunpack.c.l.b16 %v660
        %v860 = vunpack.c.l.b16 %v661
        %v861 = vunpack.c.l.b16 %v662
        %v862 = vunpack.c.l.b16 %v663
        %v863 = vunpack.c.l.b16 %v664
        %v864 = vunpack.c.l.b16 %v665
        %v865 = vunpack.c.l.b16 %v666
        %v866 = vunpack.c.l.b16 %v667
        %v867 = vunpack.c.l.b16 %v668
        %v868 = vunpack.c.l.b16 %v669
        %v869 = vunpack.c.l.b16 %v670
        %v870 = vunpack.c.l.b16 %v671
        %v871 = vunpack.c.l.b16 %v672
        %v872 = vunpack.c.l.b16 %v673
        %v873 = vunpack.c.l.b16 %v674
        %v874 = vunpack.c.l.b16 %v675
        %v875 = vunpack.c.l.b16 %v676
        %v876 = vunpack.c.l.b16 %v677
        %v877 = vunpack.c.l.b16 %v678
        %v878 = vunpack.c.l.b16 %v679
        %v879 = vunpack.c.l.b16 %v680
        %v880 = vunpack.c.l.b16 %v681
        %v881 = vunpack.c.l.b16 %v682
        %v882 = vpack.c.b16 %v787, %v786
        %v883 = vpack.c.b16 %v789, %v788
        %v884 = vpack.c.b16 %v791, %v790
        %v885 = vpack.c.b16 %v793, %v792
        %v886 = vpack.c.b16 %v795, %v794
        %v887 = vpack.c.b16 %v797, %v796
        %v888 = vpack.c.b16 %v799, %v798
        %v889 = vpack.c.b16 %v801, %v800
        %v890 = vpack.c.b16 %v803, %v802
        %v891 = vpack.c.b16 %v805, %v804
        %v892 = vpack.c.b16 %v807, %v806
        %v893 = vpack.c.b16 %v809, %v808
        %v894 = vpack.c.b16 %v811, %v810
        %v895 = vpack.c.b16 %v813, %v812
        %v896 = vpack.c.b16 %v815, %v814
        %v897 = vpack.c.b16 %v817, %v816
        %v898 = vpack.c.b16 %v819, %v818
        %v899 = vpack.c.b16 %v821, %v820
        %v900 = vpack.c.b16 %v823, %v822
        %v901 = vpack.c.b16 %v825, %v824
        %v902 = vpack.c.b16 %v827, %v826
        %v903 = vpack.c.b16 %v829, %v828
        %v904 = vpack.c.b16 %v831, %v830
        %v905 = vpack.c.b16 %v833, %v832
        %v906 = vpack.c.b16 %v835, %v834
        %v907 = vpack.c.b16 %v837, %v836
        %v908 = vpack.c.b16 %v839, %v838
        %v909 = vpack.c.b16 %v841, %v840
        %v910 = vpack.c.b16 %v843, %v842
        %v911 = vpack.c.b16 %v845, %v844
        %v912 = vpack.c.b16 %v847, %v846
        %v913 = vpack.c.b16 %v849, %v848
        %v914 = vpack.c.b16 %v851, %v850
        %v915 = vpack.c.b16 %v853, %v852
        %v916 = vpack.c.b16 %v855, %v854
        %v917 = vpack.c.b16 %v857, %v856
        %v918 = vpack.c.b16 %v859, %v858
        %v919 = vpack.c.b16 %v861, %v860
        %v920 = vpack.c.b16 %v863, %v862
        %v921 = vpack.c.b16 %v865, %v864
        %v922 = vpack.c.b16 %v867, %v866
        %v923 = vpack.c.b16 %v869, %v868
        %v924 = vpack.c.b16 %v871, %v870
        %v925 = vpack.c.b16 %v873, %v872
        %v926 = vpack.c.b16 %v875, %v874
        %v927 = vpack.c.b16 %v877, %v876
        %v928 = vpack.c.b16 %v879, %v878
        %v929 = vpack.c.b16 %v881, %v880
        %978 = vmatprep.subr.bf16.mxu0 0
        %979 = vmatpush1.bf16.msra.mxu0 %v882
        %980 = vmatprep.subr.bf16.mxu0 0
        %981 = vmatpush1.bf16.msra.mxu0 %v883
        %982 = vmatprep.subr.bf16.mxu0 0
        %983 = vmatpush1.bf16.msra.mxu0 %v884
        %984 = vmatprep.subr.bf16.mxu0 0
        %985 = vmatpush1.bf16.msra.mxu0 %v885
        %986 = vmatprep.subr.bf16.mxu0 0
        %987 = vmatpush1.bf16.msra.mxu0 %v886
        %988 = vmatprep.subr.bf16.mxu0 0
        %989 = vmatpush1.bf16.msra.mxu0 %v887
        %990 = vmatprep.subr.bf16.mxu0 0
        %991 = vmatpush1.bf16.msra.mxu0 %v888
        %992 = vmatprep.subr.bf16.mxu0 0
        %993 = vmatpush1.bf16.msra.mxu0 %v889
        %994 = vmatprep.subr.bf16.mxu0 0
        %995 = vmatpush1.bf16.msra.mxu0 %v890
        %996 = vmatprep.subr.bf16.mxu0 0
        %997 = vmatpush1.bf16.msra.mxu0 %v891
        %998 = vmatprep.subr.bf16.mxu0 0
        %999 = vmatpush1.bf16.msra.mxu0 %v892
        %1000 = vmatprep.subr.bf16.mxu0 0
        %1001 = vmatpush1.bf16.msra.mxu0 %v893
        %1002 = vmatprep.subr.bf16.mxu0 0
        %1003 = vmatpush1.bf16.msra.mxu0 %v894
        %1004 = vmatprep.subr.bf16.mxu0 0
        %1005 = vmatpush1.bf16.msra.mxu0 %v895
        %1006 = vmatprep.subr.bf16.mxu0 0
        %1007 = vmatpush1.bf16.msra.mxu0 %v896
        %1008 = vmatprep.subr.bf16.mxu0 0
        %1009 = vmatpush1.bf16.msra.mxu0 %v897
        %1010 = vmatprep.mubr.bf16.mxu0 %v582
        %1011 = vmatmul.mubr.bf16.gmra.mrb[0].mxu0 %v581
        %v1012 = vpop.f32.mrb[0].mxu0
        %v1013 = vadd.f32 %v688, %v1012
        %v1014 = vpop.f32.mrb[0].mxu0
        %v1015 = vpop.f32.mrb[0].mxu0
        %v1016 = vpop.f32.mrb[0].mxu0
        %1017 = vdwg.mxu0
        %1018 = vmatprep.subr.bf16.mxu0 0
        %1019 = vmatpush1.bf16.msra.mxu0 %v898
        %1020 = vmatprep.subr.bf16.mxu0 0
        %1021 = vmatpush1.bf16.msra.mxu0 %v899
        %1022 = vmatprep.subr.bf16.mxu0 0
        %1023 = vmatpush1.bf16.msra.mxu0 %v900
        %1024 = vmatprep.subr.bf16.mxu0 0
        %1025 = vmatpush1.bf16.msra.mxu0 %v901
        %1026 = vmatprep.subr.bf16.mxu0 0
        %1027 = vmatpush1.bf16.msra.mxu0 %v902
        %1028 = vmatprep.subr.bf16.mxu0 0
        %1029 = vmatpush1.bf16.msra.mxu0 %v903
        %1030 = vmatprep.subr.bf16.mxu0 0
        %1031 = vmatpush1.bf16.msra.mxu0 %v904
        %1032 = vmatprep.subr.bf16.mxu0 0
        %1033 = vmatpush1.bf16.msra.mxu0 %v905
        %1034 = vmatprep.subr.bf16.mxu0 0
        %1035 = vmatpush1.bf16.msra.mxu0 %v906
        %1036 = vmatprep.subr.bf16.mxu0 0
        %1037 = vmatpush1.bf16.msra.mxu0 %v907
        %1038 = vmatprep.subr.bf16.mxu0 0
        %1039 = vmatpush1.bf16.msra.mxu0 %v908
        %1040 = vmatprep.subr.bf16.mxu0 0
        %1041 = vmatpush1.bf16.msra.mxu0 %v909
        %1042 = vmatprep.subr.bf16.mxu0 0
        %1043 = vmatpush1.bf16.msra.mxu0 %v910
        %1044 = vmatprep.subr.bf16.mxu0 0
        %1045 = vmatpush1.bf16.msra.mxu0 %v911
        %1046 = vmatprep.subr.bf16.mxu0 0
        %1047 = vmatpush1.bf16.msra.mxu0 %v912
        %1048 = vmatprep.subr.bf16.mxu0 0
        %1049 = vmatpush1.bf16.msra.mxu0 %v913
        %1050 = vmatprep.mubr.bf16.mxu0 %v584
        %1051 = vmatmul.mubr.bf16.gmra.mrb[0].mxu0 %v583
        %v1052 = vpop.f32.mrb[0].mxu0
        %v1053 = vadd.f32 %v1013, %v1052
        %v1054 = vpop.f32.mrb[0].mxu0
        %v1055 = vpop.f32.mrb[0].mxu0
        %v1056 = vpop.f32.mrb[0].mxu0
        %1057 = vdwg.mxu0
        %1058 = vmatprep.subr.bf16.mxu0 0
        %1059 = vmatpush1.bf16.msra.mxu0 %v914
        %1060 = vmatprep.subr.bf16.mxu0 0
        %1061 = vmatpush1.bf16.msra.mxu0 %v915
        %1062 = vmatprep.subr.bf16.mxu0 0
        %1063 = vmatpush1.bf16.msra.mxu0 %v916
        %1064 = vmatprep.subr.bf16.mxu0 0
        %1065 = vmatpush1.bf16.msra.mxu0 %v917
        %1066 = vmatprep.subr.bf16.mxu0 0
        %1067 = vmatpush1.bf16.msra.mxu0 %v918
        %1068 = vmatprep.subr.bf16.mxu0 0
        %1069 = vmatpush1.bf16.msra.mxu0 %v919
        %1070 = vmatprep.subr.bf16.mxu0 0
        %1071 = vmatpush1.bf16.msra.mxu0 %v920
        %1072 = vmatprep.subr.bf16.mxu0 0
        %1073 = vmatpush1.bf16.msra.mxu0 %v921
        %1074 = vmatprep.subr.bf16.mxu0 0
        %1075 = vmatpush1.bf16.msra.mxu0 %v922
        %1076 = vmatprep.subr.bf16.mxu0 0
        %1077 = vmatpush1.bf16.msra.mxu0 %v923
        %1078 = vmatprep.subr.bf16.mxu0 0
        %1079 = vmatpush1.bf16.msra.mxu0 %v924
        %1080 = vmatprep.subr.bf16.mxu0 0
        %1081 = vmatpush1.bf16.msra.mxu0 %v925
        %1082 = vmatprep.subr.bf16.mxu0 0
        %1083 = vmatpush1.bf16.msra.mxu0 %v926
        %1084 = vmatprep.subr.bf16.mxu0 0
        %1085 = vmatpush1.bf16.msra.mxu0 %v927
        %1086 = vmatprep.subr.bf16.mxu0 0
        %1087 = vmatpush1.bf16.msra.mxu0 %v928
        %1088 = vmatprep.subr.bf16.mxu0 0
        %1089 = vmatpush1.bf16.msra.mxu0 %v929
        %1090 = vmatprep.mubr.bf16.mxu0 %v586
        %1091 = vmatmul.mubr.bf16.gmra.mrb[0].mxu0 %v585
        %v1092 = vpop.f32.mrb[0].mxu0
        %v1093 = vadd.f32 %v1053, %v1092
        %v1094 = vpop.f32.mrb[0].mxu0
        %v1095 = vpop.f32.mrb[0].mxu0
        %v1096 = vpop.f32.mrb[0].mxu0
        %1097 = vdwg.mxu0
        %v1098 = vmax.f32 %v1093, 0.0
        %1099 = vst [vmem:[#allocation4] sm:$0x7] 0.0
        %1100 = vst [vmem:[#allocation4 + $0xb] sm:$0xf] 0.0
        %1101 = vst [vmem:[#allocation4 + $0x3] sm:$0xff] %v1098
        %v1102 = vld [vmem:[#allocation4] sm:$0xff]
        %v1103 = vld [vmem:[#allocation4 + $0x1] sm:$0xff]
        %v1104 = vld [vmem:[#allocation4 + $0x2] sm:$0xff]
        %v1105 = vld [vmem:[#allocation4 + $0x3] sm:$0xff]
        %v1106 = vld [vmem:[#allocation4 + $0x4] sm:$0xff]
        %v1107 = vld [vmem:[#allocation4 + $0x5] sm:$0xff]
        %v1108 = vld [vmem:[#allocation4 + $0x6] sm:$0xff]
        %v1109 = vld [vmem:[#allocation4 + $0x7] sm:$0xff]
        %v1110 = vpack.c.bf16 %v1102, %v1102
        %v1111 = vpack.c.bf16 %v1103, %v1103
        %v1112 = vpack.c.bf16 %v1104, %v1104
        %v1113 = vpack.c.bf16 %v1105, %v1105
        %v1114 = vpack.c.bf16 %v1106, %v1106
        %v1115 = vpack.c.bf16 %v1107, %v1107
        %v1116 = vpack.c.bf16 %v1108, %v1108
        %v1117 = vpack.c.bf16 %v1109, %v1109
        %v1118 = vld [vmem:[#allocation11] sm:$0xf]
        %v1119 = vld [vmem:[#allocation11 + $0x4] sm:$0xf]
        %v1120 = vld [vmem:[#allocation11 + $0x8] sm:$0xf]
        %v1121 = vld [vmem:[#allocation11 + $0xc] sm:$0xf]
        %v1122 = vld [vmem:[#allocation11 + $0x10] sm:$0xf]
        %v1123 = vld [vmem:[#allocation11 + $0x14] sm:$0xf]
        %v1124 = vld [vmem:[#allocation11 + $0x18] sm:$0xf]
        %v1125 = vld [vmem:[#allocation11 + $0x1c] sm:$0xf]
        %v1126 = vld [vmem:[#allocation11 + $0x20] sm:$0xf]
        %v1127 = vld [vmem:[#allocation11 + $0x24] sm:$0xf]
        %v1128 = vld [vmem:[#allocation11 + $0x28] sm:$0xf]
        %v1129 = vld [vmem:[#allocation11 + $0x2c] sm:$0xf]
        %v1130 = vld [vmem:[#allocation11 + $0x30] sm:$0xf]
        %v1131 = vld [vmem:[#allocation11 + $0x34] sm:$0xf]
        %v1132 = vld [vmem:[#allocation11 + $0x38] sm:$0xf]
        %v1133 = vld [vmem:[#allocation11 + $0x3c] sm:$0xf]
        %v1134 = vld [vmem:[#allocation11 + $0x40] sm:$0xf]
        %v1135 = vld [vmem:[#allocation11 + $0x44] sm:$0xf]
        %v1136 = vld [vmem:[#allocation11 + $0x48] sm:$0xf]
        %v1137 = vld [vmem:[#allocation11 + $0x4c] sm:$0xf]
        %v1138 = vld [vmem:[#allocation11 + $0x50] sm:$0xf]
        %v1139 = vld [vmem:[#allocation11 + $0x54] sm:$0xf]
        %v1140 = vld [vmem:[#allocation11 + $0x58] sm:$0xf]
        %v1141 = vld [vmem:[#allocation11 + $0x5c] sm:$0xf]
        %v1142 = vld [vmem:[#allocation11 + $0x60] sm:$0xf]
        %v1143 = vld [vmem:[#allocation11 + $0x64] sm:$0xf]
        %v1144 = vld [vmem:[#allocation11 + $0x68] sm:$0xf]
        %v1145 = vld [vmem:[#allocation11 + $0x6c] sm:$0xf]
        %v1146 = vld [vmem:[#allocation11 + $0x70] sm:$0xf]
        %v1147 = vld [vmem:[#allocation11 + $0x74] sm:$0xf]
        %v1148 = vld [vmem:[#allocation11 + $0x78] sm:$0xf]
        %v1149 = vld [vmem:[#allocation11 + $0x7c] sm:$0xf]
        %v1150 = vld [vmem:[#allocation11 + $0x80] sm:$0xf]
        %v1151 = vld [vmem:[#allocation11 + $0x84] sm:$0xf]
        %v1152 = vld [vmem:[#allocation11 + $0x88] sm:$0xf]
        %v1153 = vld [vmem:[#allocation11 + $0x8c] sm:$0xf]
        %v1154 = vld [vmem:[#allocation11 + $0x90] sm:$0xf]
        %v1155 = vld [vmem:[#allocation11 + $0x94] sm:$0xf]
        %v1156 = vld [vmem:[#allocation11 + $0x98] sm:$0xf]
        %v1157 = vld [vmem:[#allocation11 + $0x9c] sm:$0xf]
        %v1158 = vld [vmem:[#allocation11 + $0xa0] sm:$0xf]
        %v1159 = vld [vmem:[#allocation11 + $0xa4] sm:$0xf]
        %v1160 = vld [vmem:[#allocation11 + $0xa8] sm:$0xf]
        %v1161 = vld [vmem:[#allocation11 + $0xac] sm:$0xf]
        %v1162 = vld [vmem:[#allocation11 + $0xb0] sm:$0xf]
        %v1163 = vld [vmem:[#allocation11 + $0xb4] sm:$0xf]
        %v1164 = vld [vmem:[#allocation11 + $0xb8] sm:$0xf]
        %v1165 = vld [vmem:[#allocation11 + $0xbc] sm:$0xf]
        %v1166 = vld [vmem:[#allocation11 + $0xc0] sm:$0xf]
        %v1167 = vld [vmem:[#allocation11 + $0xc4] sm:$0xf]
        %v1168 = vld [vmem:[#allocation11 + $0xc8] sm:$0xf]
        %v1169 = vld [vmem:[#allocation11 + $0xcc] sm:$0xf]
        %v1170 = vld [vmem:[#allocation11 + $0xd0] sm:$0xf]
        %v1171 = vld [vmem:[#allocation11 + $0xd4] sm:$0xf]
        %v1172 = vld [vmem:[#allocation11 + $0xd8] sm:$0xf]
        %v1173 = vld [vmem:[#allocation11 + $0xdc] sm:$0xf]
        %v1174 = vld [vmem:[#allocation11 + $0xe0] sm:$0xf]
        %v1175 = vld [vmem:[#allocation11 + $0xe4] sm:$0xf]
        %v1176 = vld [vmem:[#allocation11 + $0xe8] sm:$0xf]
        %v1177 = vld [vmem:[#allocation11 + $0xec] sm:$0xf]
        %v1178 = vld [vmem:[#allocation11 + $0xf0] sm:$0xf]
        %v1179 = vld [vmem:[#allocation11 + $0xf4] sm:$0xf]
        %v1180 = vld [vmem:[#allocation11 + $0xf8] sm:$0xf]
        %v1181 = vld [vmem:[#allocation11 + $0xfc] sm:$0xf]
        %v1182 = vld [vmem:[#allocation11 + $0x100] sm:$0xf]
        %v1183 = vld [vmem:[#allocation11 + $0x104] sm:$0xf]
        %v1184 = vld [vmem:[#allocation11 + $0x108] sm:$0xf]
        %v1185 = vld [vmem:[#allocation11 + $0x10c] sm:$0xf]
        %v1186 = vld [vmem:[#allocation11 + $0x110] sm:$0xf]
        %v1187 = vld [vmem:[#allocation11 + $0x114] sm:$0xf]
        %v1188 = vld [vmem:[#allocation11 + $0x118] sm:$0xf]
        %v1189 = vld [vmem:[#allocation11 + $0x11c] sm:$0xf]
        %v1190 = vld [vmem:[#allocation11 + $0x120] sm:$0xf]
        %v1191 = vld [vmem:[#allocation11 + $0x124] sm:$0xf]
        %v1192 = vld [vmem:[#allocation11 + $0x128] sm:$0xf]
        %v1193 = vld [vmem:[#allocation11 + $0x12c] sm:$0xf]
        %v1194 = vld [vmem:[#allocation11 + $0x130] sm:$0xf]
        %v1195 = vld [vmem:[#allocation11 + $0x134] sm:$0xf]
        %v1196 = vld [vmem:[#allocation11 + $0x138] sm:$0xf]
        %v1197 = vld [vmem:[#allocation11 + $0x13c] sm:$0xf]
        %v1198 = vld [vmem:[#allocation11 + $0x140] sm:$0xf]
        %v1199 = vld [vmem:[#allocation11 + $0x144] sm:$0xf]
        %v1200 = vld [vmem:[#allocation11 + $0x148] sm:$0xf]
        %v1201 = vld [vmem:[#allocation11 + $0x14c] sm:$0xf]
        %v1202 = vld [vmem:[#allocation11 + $0x150] sm:$0xf]
        %v1203 = vld [vmem:[#allocation11 + $0x154] sm:$0xf]
        %v1204 = vld [vmem:[#allocation11 + $0x158] sm:$0xf]
        %v1205 = vld [vmem:[#allocation11 + $0x15c] sm:$0xf]
        %v1206 = vld [vmem:[#allocation11 + $0x160] sm:$0xf]
        %v1207 = vld [vmem:[#allocation11 + $0x164] sm:$0xf]
        %v1208 = vld [vmem:[#allocation11 + $0x168] sm:$0xf]
        %v1209 = vld [vmem:[#allocation11 + $0x16c] sm:$0xf]
        %v1210 = vld [vmem:[#allocation11 + $0x170] sm:$0xf]
        %v1211 = vld [vmem:[#allocation11 + $0x174] sm:$0xf]
        %v1212 = vld [vmem:[#allocation11 + $0x178] sm:$0xf]
        %v1213 = vld [vmem:[#allocation11 + $0x17c] sm:$0xf]
        %v1214 = vld [vmem:[#allocation11 + $0x180] sm:$0xf]
        %v1215 = vld [vmem:[#allocation11 + $0x184] sm:$0xf]
        %v1216 = vld [vmem:[#allocation11 + $0x188] sm:$0xf]
        %v1217 = vld [vmem:[#allocation11 + $0x18c] sm:$0xf]
        %v1218 = vld [vmem:[#allocation11 + $0x190] sm:$0xf]
        %v1219 = vld [vmem:[#allocation11 + $0x194] sm:$0xf]
        %v1220 = vld [vmem:[#allocation11 + $0x198] sm:$0xf]
        %v1221 = vld [vmem:[#allocation11 + $0x19c] sm:$0xf]
        %v1222 = vld [vmem:[#allocation11 + $0x1a0] sm:$0xf]
        %v1223 = vld [vmem:[#allocation11 + $0x1a4] sm:$0xf]
        %v1224 = vld [vmem:[#allocation11 + $0x1a8] sm:$0xf]
        %v1225 = vld [vmem:[#allocation11 + $0x1ac] sm:$0xf]
        %v1226 = vld [vmem:[#allocation11 + $0x1b0] sm:$0xf]
        %v1227 = vld [vmem:[#allocation11 + $0x1b4] sm:$0xf]
        %v1228 = vld [vmem:[#allocation11 + $0x1b8] sm:$0xf]
        %v1229 = vld [vmem:[#allocation11 + $0x1bc] sm:$0xf]
        %v1230 = vld [vmem:[#allocation11 + $0x1c0] sm:$0xf]
        %v1231 = vld [vmem:[#allocation11 + $0x1c4] sm:$0xf]
        %v1232 = vld [vmem:[#allocation11 + $0x1c8] sm:$0xf]
        %v1233 = vld [vmem:[#allocation11 + $0x1cc] sm:$0xf]
        %v1234 = vld [vmem:[#allocation11 + $0x1d0] sm:$0xf]
        %v1235 = vld [vmem:[#allocation11 + $0x1d4] sm:$0xf]
        %v1236 = vld [vmem:[#allocation11 + $0x1d8] sm:$0xf]
        %v1237 = vld [vmem:[#allocation11 + $0x1dc] sm:$0xf]
        %v1238 = vld [vmem:[#allocation11 + $0x1e0] sm:$0xf]
        %v1239 = vld [vmem:[#allocation11 + $0x1e4] sm:$0xf]
        %v1240 = vld [vmem:[#allocation11 + $0x1e8] sm:$0xf]
        %v1241 = vld [vmem:[#allocation11 + $0x1ec] sm:$0xf]
        %v1242 = vld [vmem:[#allocation11 + $0x1f0] sm:$0xf]
        %v1243 = vld [vmem:[#allocation11 + $0x1f4] sm:$0xf]
        %v1244 = vld [vmem:[#allocation11 + $0x1f8] sm:$0xf]
        %v1245 = vld [vmem:[#allocation11 + $0x1fc] sm:$0xf]
        %v1246 = vld [vmem:[%s6] sm:$0x1]
        %v1248 = vlaneseq
        %v1249 = vshrl.u32 %v1248, 7
        %v1250 = vsub.s32 0, %v1249
        %v1251 = vrot.slane %v1246, %v1250
        %v1381 = vunpack.c.l.b16 %v1118
        %v1382 = vunpack.c.l.b16 %v1119
        %v1383 = vunpack.c.l.b16 %v1120
        %v1384 = vunpack.c.l.b16 %v1121
        %v1385 = vunpack.c.l.b16 %v1122
        %v1386 = vunpack.c.l.b16 %v1123
        %v1387 = vunpack.c.l.b16 %v1124
        %v1388 = vunpack.c.l.b16 %v1125
        %v1389 = vunpack.c.l.b16 %v1126
        %v1390 = vunpack.c.l.b16 %v1127
        %v1391 = vunpack.c.l.b16 %v1128
        %v1392 = vunpack.c.l.b16 %v1129
        %v1393 = vunpack.c.l.b16 %v1130
        %v1394 = vunpack.c.l.b16 %v1131
        %v1395 = vunpack.c.l.b16 %v1132
        %v1396 = vunpack.c.l.b16 %v1133
        %v1397 = vunpack.c.l.b16 %v1134
        %v1398 = vunpack.c.l.b16 %v1135
        %v1399 = vunpack.c.l.b16 %v1136
        %v1400 = vunpack.c.l.b16 %v1137
        %v1401 = vunpack.c.l.b16 %v1138
        %v1402 = vunpack.c.l.b16 %v1139
        %v1403 = vunpack.c.l.b16 %v1140
        %v1404 = vunpack.c.l.b16 %v1141
        %v1405 = vunpack.c.l.b16 %v1142
        %v1406 = vunpack.c.l.b16 %v1143
        %v1407 = vunpack.c.l.b16 %v1144
        %v1408 = vunpack.c.l.b16 %v1145
        %v1409 = vunpack.c.l.b16 %v1146
        %v1410 = vunpack.c.l.b16 %v1147
        %v1411 = vunpack.c.l.b16 %v1148
        %v1412 = vunpack.c.l.b16 %v1149
        %v1413 = vunpack.c.l.b16 %v1150
        %v1414 = vunpack.c.l.b16 %v1151
        %v1415 = vunpack.c.l.b16 %v1152
        %v1416 = vunpack.c.l.b16 %v1153
        %v1417 = vunpack.c.l.b16 %v1154
        %v1418 = vunpack.c.l.b16 %v1155
        %v1419 = vunpack.c.l.b16 %v1156
        %v1420 = vunpack.c.l.b16 %v1157
        %v1421 = vunpack.c.l.b16 %v1158
        %v1422 = vunpack.c.l.b16 %v1159
        %v1423 = vunpack.c.l.b16 %v1160
        %v1424 = vunpack.c.l.b16 %v1161
        %v1425 = vunpack.c.l.b16 %v1162
        %v1426 = vunpack.c.l.b16 %v1163
        %v1427 = vunpack.c.l.b16 %v1164
        %v1428 = vunpack.c.l.b16 %v1165
        %v1429 = vunpack.c.l.b16 %v1166
        %v1430 = vunpack.c.l.b16 %v1167
        %v1431 = vunpack.c.l.b16 %v1168
        %v1432 = vunpack.c.l.b16 %v1169
        %v1433 = vunpack.c.l.b16 %v1170
        %v1434 = vunpack.c.l.b16 %v1171
        %v1435 = vunpack.c.l.b16 %v1172
        %v1436 = vunpack.c.l.b16 %v1173
        %v1437 = vunpack.c.l.b16 %v1174
        %v1438 = vunpack.c.l.b16 %v1175
        %v1439 = vunpack.c.l.b16 %v1176
        %v1440 = vunpack.c.l.b16 %v1177
        %v1441 = vunpack.c.l.b16 %v1178
        %v1442 = vunpack.c.l.b16 %v1179
        %v1443 = vunpack.c.l.b16 %v1180
        %v1444 = vunpack.c.l.b16 %v1181
        %v1445 = vunpack.c.l.b16 %v1182
        %v1446 = vunpack.c.l.b16 %v1183
        %v1447 = vunpack.c.l.b16 %v1184
        %v1448 = vunpack.c.l.b16 %v1185
        %v1449 = vunpack.c.l.b16 %v1186
        %v1450 = vunpack.c.l.b16 %v1187
        %v1451 = vunpack.c.l.b16 %v1188
        %v1452 = vunpack.c.l.b16 %v1189
        %v1453 = vunpack.c.l.b16 %v1190
        %v1454 = vunpack.c.l.b16 %v1191
        %v1455 = vunpack.c.l.b16 %v1192
        %v1456 = vunpack.c.l.b16 %v1193
        %v1457 = vunpack.c.l.b16 %v1194
        %v1458 = vunpack.c.l.b16 %v1195
        %v1459 = vunpack.c.l.b16 %v1196
        %v1460 = vunpack.c.l.b16 %v1197
        %v1461 = vunpack.c.l.b16 %v1198
        %v1462 = vunpack.c.l.b16 %v1199
        %v1463 = vunpack.c.l.b16 %v1200
        %v1464 = vunpack.c.l.b16 %v1201
        %v1465 = vunpack.c.l.b16 %v1202
        %v1466 = vunpack.c.l.b16 %v1203
        %v1467 = vunpack.c.l.b16 %v1204
        %v1468 = vunpack.c.l.b16 %v1205
        %v1469 = vunpack.c.l.b16 %v1206
        %v1470 = vunpack.c.l.b16 %v1207
        %v1471 = vunpack.c.l.b16 %v1208
        %v1472 = vunpack.c.l.b16 %v1209
        %v1473 = vunpack.c.l.b16 %v1210
        %v1474 = vunpack.c.l.b16 %v1211
        %v1475 = vunpack.c.l.b16 %v1212
        %v1476 = vunpack.c.l.b16 %v1213
        %v1477 = vunpack.c.l.b16 %v1214
        %v1478 = vunpack.c.l.b16 %v1215
        %v1479 = vunpack.c.l.b16 %v1216
        %v1480 = vunpack.c.l.b16 %v1217
        %v1481 = vunpack.c.l.b16 %v1218
        %v1482 = vunpack.c.l.b16 %v1219
        %v1483 = vunpack.c.l.b16 %v1220
        %v1484 = vunpack.c.l.b16 %v1221
        %v1485 = vunpack.c.l.b16 %v1222
        %v1486 = vunpack.c.l.b16 %v1223
        %v1487 = vunpack.c.l.b16 %v1224
        %v1488 = vunpack.c.l.b16 %v1225
        %v1489 = vunpack.c.l.b16 %v1226
        %v1490 = vunpack.c.l.b16 %v1227
        %v1491 = vunpack.c.l.b16 %v1228
        %v1492 = vunpack.c.l.b16 %v1229
        %v1493 = vunpack.c.l.b16 %v1230
        %v1494 = vunpack.c.l.b16 %v1231
        %v1495 = vunpack.c.l.b16 %v1232
        %v1496 = vunpack.c.l.b16 %v1233
        %v1497 = vunpack.c.l.b16 %v1234
        %v1498 = vunpack.c.l.b16 %v1235
        %v1499 = vunpack.c.l.b16 %v1236
        %v1500 = vunpack.c.l.b16 %v1237
        %v1501 = vunpack.c.l.b16 %v1238
        %v1502 = vunpack.c.l.b16 %v1239
        %v1503 = vunpack.c.l.b16 %v1240
        %v1504 = vunpack.c.l.b16 %v1241
        %v1505 = vunpack.c.l.b16 %v1242
        %v1506 = vunpack.c.l.b16 %v1243
        %v1507 = vunpack.c.l.b16 %v1244
        %v1508 = vunpack.c.l.b16 %v1245
        %v1509 = vpack.c.b16 %v1382, %v1381
        %v1510 = vpack.c.b16 %v1384, %v1383
        %v1511 = vpack.c.b16 %v1386, %v1385
        %v1512 = vpack.c.b16 %v1388, %v1387
        %v1513 = vpack.c.b16 %v1390, %v1389
        %v1514 = vpack.c.b16 %v1392, %v1391
        %v1515 = vpack.c.b16 %v1394, %v1393
        %v1516 = vpack.c.b16 %v1396, %v1395
        %v1517 = vpack.c.b16 %v1398, %v1397
        %v1518 = vpack.c.b16 %v1400, %v1399
        %v1519 = vpack.c.b16 %v1402, %v1401
        %v1520 = vpack.c.b16 %v1404, %v1403
        %v1521 = vpack.c.b16 %v1406, %v1405
        %v1522 = vpack.c.b16 %v1408, %v1407
        %v1523 = vpack.c.b16 %v1410, %v1409
        %v1524 = vpack.c.b16 %v1412, %v1411
        %v1525 = vpack.c.b16 %v1414, %v1413
        %v1526 = vpack.c.b16 %v1416, %v1415
        %v1527 = vpack.c.b16 %v1418, %v1417
        %v1528 = vpack.c.b16 %v1420, %v1419
        %v1529 = vpack.c.b16 %v1422, %v1421
        %v1530 = vpack.c.b16 %v1424, %v1423
        %v1531 = vpack.c.b16 %v1426, %v1425
        %v1532 = vpack.c.b16 %v1428, %v1427
        %v1533 = vpack.c.b16 %v1430, %v1429
        %v1534 = vpack.c.b16 %v1432, %v1431
        %v1535 = vpack.c.b16 %v1434, %v1433
        %v1536 = vpack.c.b16 %v1436, %v1435
        %v1537 = vpack.c.b16 %v1438, %v1437
        %v1538 = vpack.c.b16 %v1440, %v1439
        %v1539 = vpack.c.b16 %v1442, %v1441
        %v1540 = vpack.c.b16 %v1444, %v1443
        %v1541 = vpack.c.b16 %v1446, %v1445
        %v1542 = vpack.c.b16 %v1448, %v1447
        %v1543 = vpack.c.b16 %v1450, %v1449
        %v1544 = vpack.c.b16 %v1452, %v1451
        %v1545 = vpack.c.b16 %v1454, %v1453
        %v1546 = vpack.c.b16 %v1456, %v1455
        %v1547 = vpack.c.b16 %v1458, %v1457
        %v1548 = vpack.c.b16 %v1460, %v1459
        %v1549 = vpack.c.b16 %v1462, %v1461
        %v1550 = vpack.c.b16 %v1464, %v1463
        %v1551 = vpack.c.b16 %v1466, %v1465
        %v1552 = vpack.c.b16 %v1468, %v1467
        %v1553 = vpack.c.b16 %v1470, %v1469
        %v1554 = vpack.c.b16 %v1472, %v1471
        %v1555 = vpack.c.b16 %v1474, %v1473
        %v1556 = vpack.c.b16 %v1476, %v1475
        %v1557 = vpack.c.b16 %v1478, %v1477
        %v1558 = vpack.c.b16 %v1480, %v1479
        %v1559 = vpack.c.b16 %v1482, %v1481
        %v1560 = vpack.c.b16 %v1484, %v1483
        %v1561 = vpack.c.b16 %v1486, %v1485
        %v1562 = vpack.c.b16 %v1488, %v1487
        %v1563 = vpack.c.b16 %v1490, %v1489
        %v1564 = vpack.c.b16 %v1492, %v1491
        %v1565 = vpack.c.b16 %v1494, %v1493
        %v1566 = vpack.c.b16 %v1496, %v1495
        %v1567 = vpack.c.b16 %v1498, %v1497
        %v1568 = vpack.c.b16 %v1500, %v1499
        %v1569 = vpack.c.b16 %v1502, %v1501
        %v1570 = vpack.c.b16 %v1504, %v1503
        %v1571 = vpack.c.b16 %v1506, %v1505
        %v1572 = vpack.c.b16 %v1508, %v1507
        %1637 = vmatprep.subr.bf16.mxu0 0
        %1638 = vmatpush1.bf16.msra.mxu0 %v1509
        %1639 = vmatprep.subr.bf16.mxu0 0
        %1640 = vmatpush1.bf16.msra.mxu0 %v1510
        %1641 = vmatprep.subr.bf16.mxu0 0
        %1642 = vmatpush1.bf16.msra.mxu0 %v1511
        %1643 = vmatprep.subr.bf16.mxu0 0
        %1644 = vmatpush1.bf16.msra.mxu0 %v1512
        %1645 = vmatprep.subr.bf16.mxu0 0
        %1646 = vmatpush1.bf16.msra.mxu0 %v1513
        %1647 = vmatprep.subr.bf16.mxu0 0
        %1648 = vmatpush1.bf16.msra.mxu0 %v1514
        %1649 = vmatprep.subr.bf16.mxu0 0
        %1650 = vmatpush1.bf16.msra.mxu0 %v1515
        %1651 = vmatprep.subr.bf16.mxu0 0
        %1652 = vmatpush1.bf16.msra.mxu0 %v1516
        %1653 = vmatprep.subr.bf16.mxu0 0
        %1654 = vmatpush1.bf16.msra.mxu0 %v1517
        %1655 = vmatprep.subr.bf16.mxu0 0
        %1656 = vmatpush1.bf16.msra.mxu0 %v1518
        %1657 = vmatprep.subr.bf16.mxu0 0
        %1658 = vmatpush1.bf16.msra.mxu0 %v1519
        %1659 = vmatprep.subr.bf16.mxu0 0
        %1660 = vmatpush1.bf16.msra.mxu0 %v1520
        %1661 = vmatprep.subr.bf16.mxu0 0
        %1662 = vmatpush1.bf16.msra.mxu0 %v1521
        %1663 = vmatprep.subr.bf16.mxu0 0
        %1664 = vmatpush1.bf16.msra.mxu0 %v1522
        %1665 = vmatprep.subr.bf16.mxu0 0
        %1666 = vmatpush1.bf16.msra.mxu0 %v1523
        %1667 = vmatprep.subr.bf16.mxu0 0
        %1668 = vmatpush1.bf16.msra.mxu0 %v1524
        %1669 = vmatprep.mubr.bf16.mxu0 %v1111
        %1670 = vmatmul.mubr.bf16.gmra.mrb[0].mxu0 %v1110
        %v1671 = vpop.f32.mrb[0].mxu0
        %v1672 = vadd.f32 %v1251, %v1671
        %v1673 = vpop.f32.mrb[0].mxu0
        %v1674 = vpop.f32.mrb[0].mxu0
        %v1675 = vpop.f32.mrb[0].mxu0
        %1676 = vdwg.mxu0
        %1677 = vmatprep.subr.bf16.mxu0 0
        %1678 = vmatpush1.bf16.msra.mxu0 %v1525
        %1679 = vmatprep.subr.bf16.mxu0 0
        %1680 = vmatpush1.bf16.msra.mxu0 %v1526
        %1681 = vmatprep.subr.bf16.mxu0 0
        %1682 = vmatpush1.bf16.msra.mxu0 %v1527
        %1683 = vmatprep.subr.bf16.mxu0 0
        %1684 = vmatpush1.bf16.msra.mxu0 %v1528
        %1685 = vmatprep.subr.bf16.mxu0 0
        %1686 = vmatpush1.bf16.msra.mxu0 %v1529
        %1687 = vmatprep.subr.bf16.mxu0 0
        %1688 = vmatpush1.bf16.msra.mxu0 %v1530
        %1689 = vmatprep.subr.bf16.mxu0 0
        %1690 = vmatpush1.bf16.msra.mxu0 %v1531
        %1691 = vmatprep.subr.bf16.mxu0 0
        %1692 = vmatpush1.bf16.msra.mxu0 %v1532
        %1693 = vmatprep.subr.bf16.mxu0 0
        %1694 = vmatpush1.bf16.msra.mxu0 %v1533
        %1695 = vmatprep.subr.bf16.mxu0 0
        %1696 = vmatpush1.bf16.msra.mxu0 %v1534
        %1697 = vmatprep.subr.bf16.mxu0 0
        %1698 = vmatpush1.bf16.msra.mxu0 %v1535
        %1699 = vmatprep.subr.bf16.mxu0 0
        %1700 = vmatpush1.bf16.msra.mxu0 %v1536
        %1701 = vmatprep.subr.bf16.mxu0 0
        %1702 = vmatpush1.bf16.msra.mxu0 %v1537
        %1703 = vmatprep.subr.bf16.mxu0 0
        %1704 = vmatpush1.bf16.msra.mxu0 %v1538
        %1705 = vmatprep.subr.bf16.mxu0 0
        %1706 = vmatpush1.bf16.msra.mxu0 %v1539
        %1707 = vmatprep.subr.bf16.mxu0 0
        %1708 = vmatpush1.bf16.msra.mxu0 %v1540
        %1709 = vmatprep.mubr.bf16.mxu0 %v1113
        %1710 = vmatmul.mubr.bf16.gmra.mrb[0].mxu0 %v1112
        %v1711 = vpop.f32.mrb[0].mxu0
        %v1712 = vadd.f32 %v1672, %v1711
        %v1713 = vpop.f32.mrb[0].mxu0
        %v1714 = vpop.f32.mrb[0].mxu0
        %v1715 = vpop.f32.mrb[0].mxu0
        %1716 = vdwg.mxu0
        %1717 = vmatprep.subr.bf16.mxu0 0
        %1718 = vmatpush1.bf16.msra.mxu0 %v1541
        %1719 = vmatprep.subr.bf16.mxu0 0
        %1720 = vmatpush1.bf16.msra.mxu0 %v1542
        %1721 = vmatprep.subr.bf16.mxu0 0
        %1722 = vmatpush1.bf16.msra.mxu0 %v1543
        %1723 = vmatprep.subr.bf16.mxu0 0
        %1724 = vmatpush1.bf16.msra.mxu0 %v1544
        %1725 = vmatprep.subr.bf16.mxu0 0
        %1726 = vmatpush1.bf16.msra.mxu0 %v1545
        %1727 = vmatprep.subr.bf16.mxu0 0
        %1728 = vmatpush1.bf16.msra.mxu0 %v1546
        %1729 = vmatprep.subr.bf16.mxu0 0
        %1730 = vmatpush1.bf16.msra.mxu0 %v1547
        %1731 = vmatprep.subr.bf16.mxu0 0
        %1732 = vmatpush1.bf16.msra.mxu0 %v1548
        %1733 = vmatprep.subr.bf16.mxu0 0
        %1734 = vmatpush1.bf16.msra.mxu0 %v1549
        %1735 = vmatprep.subr.bf16.mxu0 0
        %1736 = vmatpush1.bf16.msra.mxu0 %v1550
        %1737 = vmatprep.subr.bf16.mxu0 0
        %1738 = vmatpush1.bf16.msra.mxu0 %v1551
        %1739 = vmatprep.subr.bf16.mxu0 0
        %1740 = vmatpush1.bf16.msra.mxu0 %v1552
        %1741 = vmatprep.subr.bf16.mxu0 0
        %1742 = vmatpush1.bf16.msra.mxu0 %v1553
        %1743 = vmatprep.subr.bf16.mxu0 0
        %1744 = vmatpush1.bf16.msra.mxu0 %v1554
        %1745 = vmatprep.subr.bf16.mxu0 0
        %1746 = vmatpush1.bf16.msra.mxu0 %v1555
        %1747 = vmatprep.subr.bf16.mxu0 0
        %1748 = vmatpush1.bf16.msra.mxu0 %v1556
        %1749 = vmatprep.mubr.bf16.mxu0 %v1115
        %1750 = vmatmul.mubr.bf16.gmra.mrb[0].mxu0 %v1114
        %v1751 = vpop.f32.mrb[0].mxu0
        %v1752 = vadd.f32 %v1712, %v1751
        %v1753 = vpop.f32.mrb[0].mxu0
        %v1754 = vpop.f32.mrb[0].mxu0
        %v1755 = vpop.f32.mrb[0].mxu0
        %1756 = vdwg.mxu0
        %1757 = vmatprep.subr.bf16.mxu0 0
        %1758 = vmatpush1.bf16.msra.mxu0 %v1557
        %1759 = vmatprep.subr.bf16.mxu0 0
        %1760 = vmatpush1.bf16.msra.mxu0 %v1558
        %1761 = vmatprep.subr.bf16.mxu0 0
        %1762 = vmatpush1.bf16.msra.mxu0 %v1559
        %1763 = vmatprep.subr.bf16.mxu0 0
        %1764 = vmatpush1.bf16.msra.mxu0 %v1560
        %1765 = vmatprep.subr.bf16.mxu0 0
        %1766 = vmatpush1.bf16.msra.mxu0 %v1561
        %1767 = vmatprep.subr.bf16.mxu0 0
        %1768 = vmatpush1.bf16.msra.mxu0 %v1562
        %1769 = vmatprep.subr.bf16.mxu0 0
        %1770 = vmatpush1.bf16.msra.mxu0 %v1563
        %1771 = vmatprep.subr.bf16.mxu0 0
        %1772 = vmatpush1.bf16.msra.mxu0 %v1564
        %1773 = vmatprep.subr.bf16.mxu0 0
        %1774 = vmatpush1.bf16.msra.mxu0 %v1565
        %1775 = vmatprep.subr.bf16.mxu0 0
        %1776 = vmatpush1.bf16.msra.mxu0 %v1566
        %1777 = vmatprep.subr.bf16.mxu0 0
        %1778 = vmatpush1.bf16.msra.mxu0 %v1567
        %1779 = vmatprep.subr.bf16.mxu0 0
        %1780 = vmatpush1.bf16.msra.mxu0 %v1568
        %1781 = vmatprep.subr.bf16.mxu0 0
        %1782 = vmatpush1.bf16.msra.mxu0 %v1569
        %1783 = vmatprep.subr.bf16.mxu0 0
        %1784 = vmatpush1.bf16.msra.mxu0 %v1570
        %1785 = vmatprep.subr.bf16.mxu0 0
        %1786 = vmatpush1.bf16.msra.mxu0 %v1571
        %1787 = vmatprep.subr.bf16.mxu0 0
        %1788 = vmatpush1.bf16.msra.mxu0 %v1572
        %1789 = vmatprep.mubr.bf16.mxu0 %v1117
        %1790 = vmatmul.mubr.bf16.gmra.mrb[0].mxu0 %v1116
        %v1791 = vpop.f32.mrb[0].mxu0
        %v1792 = vadd.f32 %v1752, %v1791
        %v1793 = vpop.f32.mrb[0].mxu0
        %v1794 = vpop.f32.mrb[0].mxu0
        %v1795 = vpop.f32.mrb[0].mxu0
        %1796 = vdwg.mxu0
        %v1797 = vmax.f32 %v1792, 0.0
        %1798 = vst [vmem:[%s337] sm:$0xff] %v1797
        %s1799 = sand.u32 %s186, 1
        %s1800 = scalar_lea.sflag [#allocation7], %s1799
        %s1801 = sand.u32 %s186, 1
        %s1802 = smul.addr %s1801, 8
        %s1803 = scalar_lea.vmem [#allocation13], %s1802
        // Predicated region
        $region65: #{tpu_custom_call.1} parent=47 // pred_check
          %p1804 = pneg %p196
        $region66: #{tpu_custom_call.1} parent=47 // pred_check_branch
          %1806 = sbr.rel (%p1804) target = $region68
        $region67: #{tpu_custom_call.1} parent=47 // pred_region
          %s1808 = ssub.s32 128, 128
          %1809 = vsyncadd %s1800, %s1808
          %s1810 = smul.addr %s26, 128
          %s1811 = scalar_lea.hbm %s7, %s1810
          %s1813 = sshll.u32 %s1803, 4
          %s1814 = int_to_ptr.vmem [resolvable:$true] %s1813
          %1816 = dma.vmem_to_hbm [thread:$0]  %s1814, 128, %s1811, %s1800
        $region68: #{tpu_custom_call.1} parent=47 // pred_fallthru
          _
      $region48: #{tpu_custom_call.1} parent=5 // pred_fallthru
        _
      %p1817 = scmp.le.s32.totalorder 2, %s21
      // Predicated region
      $region69: #{tpu_custom_call.1} parent=5 // pred_check
        %p1818 = pneg %p1817
      $region70: #{tpu_custom_call.1} parent=5 // pred_check_branch
        %1820 = sbr.rel (%p1818) target = $region72
      $region71: #{tpu_custom_call.1} parent=5 // pred_region
        %s1821 = ssub.s32 %s21, 2
        // Predicated region
        $region73: #{tpu_custom_call.1} parent=71 // pred_check
          %p1822 = pneg %p202
        $region74: #{tpu_custom_call.1} parent=71 // pred_check_branch
          %1824 = sbr.rel (%p1822) target = $region76
        $region75: #{tpu_custom_call.1} parent=71 // pred_region
          %s1825 = sand.u32 %s187, 1
          %s1826 = scalar_lea.sflag [#allocation7], %s1825
          %s1827 = sand.u32 %s187, 1
          %s1828 = smul.addr %s1827, 8
          %s1829 = scalar_lea.vmem [#allocation13], %s1828
          %1830 = dma.done %s1826, 128
        $region76: #{tpu_custom_call.1} parent=71 // pred_fallthru
          _
      $region72: #{tpu_custom_call.1} parent=5 // pred_fallthru
        _
    $region6: #{tpu_custom_call.1} parent=1 // loop_footer
      %s25 = sadd.s32 1, %s21
    $region7: #{tpu_custom_call.1} parent=1 // loop_footer_branch
      %20 = sbr.rel target = $region3
    $region8: #{tpu_custom_call.1} parent=1 // loop_exit
      _
    %1831 = vsyncpa [#allocation6], 1
    %s1832 = scalar_lea.sflag [#allocation6], 1
    %1833 = vsyncpa %s1832, 1
    %1834 = vsyncpa [#allocation9], 1
    %1835 = vsyncpa [#allocation12], 1
    %1836 = vsyncpa [#allocation7], 1
    %s1837 = scalar_lea.sflag [#allocation7], 1
    %1838 = vsyncpa %s1837, 1

</llo_original>
